<compile_context>
chip_gen: v7x
topology: tpu7x:2x2x1
jax: 0.10.0
libtpu: 0.0.40
codegen_flags: <defaults>
</compile_context>

<pallas_src>
import jax
import jax.numpy as jnp
from jax.experimental import pallas as pl
from jax.experimental.pallas import tpu as pltpu  # noqa: F401  (kept for TPU-specific tuning hooks)

EPS = 1e-5


def bn_conv1x1_kernel(x_ref, g_ref, b_ref, w_ref, o_ref):
    # x_ref: (S, C_in)        f32   activations, S = N*H*W on sublanes, C_in on lanes
    # g_ref: (1, C_in)        f32   BN gamma
    # b_ref: (1, C_in)        f32   BN beta
    # w_ref: (C_in, C_out_pad) bf16 raw conv weight, transposed + lane-padded
    # o_ref: (S, C_out_pad)   f32
    x = x_ref[...]
    inv_s = 1.0 / x.shape[0]

    # BatchNorm2d (training mode): per-channel stats over (N, H, W) = sublane axis,
    # biased variance (1/S). Clamp E[x^2]-mean^2 against negative cancellation.
    mean = jnp.sum(x, axis=0, keepdims=True) * inv_s            # (1, C_in)
    ex2 = jnp.sum(x * x, axis=0, keepdims=True) * inv_s         # (1, C_in)
    var = jnp.maximum(ex2 - mean * mean, 0.0)
    inv_std = jax.lax.rsqrt(var + EPS)

    # Fold the affine into a single scale/shift pair (all f32, VPU-cheap).
    scale = inv_std * g_ref[...]                                # (1, C_in)
    shift = b_ref[...] - mean * scale                           # (1, C_in)
    xn = (x * scale + shift).astype(jnp.bfloat16)               # (S, C_in) bf16

    # 1x1 conv == channel-mixing matmul on the MXU (bf16 in, f32 accumulate).
    o_ref[...] = jnp.dot(xn, w_ref[...], preferred_element_type=jnp.float32)


def bn_conv1x1(x_nchw, gamma, beta, weight):
    """x_nchw: (N, C_in, H, W); gamma/beta: (C_in,); weight: (C_out, C_in, 1, 1)."""
    N, C_in, H, W = x_nchw.shape
    C_out = weight.shape[0]
    S = N * H * W

    # Lane-dense layout: (S, C_in) activations, (C_in, C_out) weights, so the
    # output lane width is C_out (unmasked 128-wide stores, full MXU N dim).
    x2d = jnp.transpose(x_nchw, (0, 2, 3, 1)).reshape(S, C_in).astype(jnp.float32)
    g2d = gamma.reshape(1, C_in).astype(jnp.float32)
    b2d = beta.reshape(1, C_in).astype(jnp.float32)

    # Raw conv weight: cast to bf16 first, then transpose + lane-pad to 13*128.
    # With static weights under jit this constant-folds to a one-time cost.
    c_pad = 128 * pl.cdiv(C_out, 128)                           # 1664 for 1632
    w_t = weight.reshape(C_out, C_in).astype(jnp.bfloat16).T    # (C_in, C_out)
    w_t = jnp.pad(w_t, ((0, 0), (0, c_pad - C_out)))            # (C_in, 1664)

    # Single grid step: whole working set (~1.4 MB) lives in VMEM on every
    # generation (v5e/v6e 128 MiB, v7x 64 MiB), so no tiling is needed.
    out2d = pl.pallas_call(
        bn_conv1x1_kernel,
        out_shape=jax.ShapeDtypeStruct((S, c_pad), jnp.float32),
    )(x2d, g2d, b2d, w_t)

    # (S, C_out_pad) -> slice -> (N, H, W, C_out) -> (N, C_out, H, W)
    out = out2d[:, :C_out].reshape(N, H, W, C_out)
    return jnp.transpose(out, (0, 3, 1, 2))


def reference(x_nchw, gamma, beta, weight):
    # Pure-JAX f32 reference for correctness checking.
    mean = jnp.mean(x_nchw, axis=(0, 2, 3), keepdims=True)
    var = jnp.mean((x_nchw - mean) ** 2, axis=(0, 2, 3), keepdims=True)
    xn = (x_nchw - mean) * jax.lax.rsqrt(var + EPS)
    xn = xn * gamma[None, :, None, None] + beta[None, :, None, None]
    w2d = weight.reshape(weight.shape[0], weight.shape[1])
    return jnp.einsum("oc,nchw->nohw", w2d, xn)


if __name__ == "__main__":
    N, C_in, H, W = 1, 272, 7, 7
    C_out = 1632

    key = jax.random.PRNGKey(0)
    kx, kg, kb, kw = jax.random.split(key, 4)

    x = jax.random.normal(kx, (N, C_in, H, W), dtype=jnp.float32)
    gamma = 1.0 + 0.1 * jax.random.normal(kg, (C_in,), dtype=jnp.float32)
    beta = 0.1 * jax.random.normal(kb, (C_in,), dtype=jnp.float32)
    # Conv2d default init scale ~ 1/sqrt(fan_in); deterministic synthetic weights.
    weight = jax.random.normal(kw, (C_out, C_in, 1, 1), dtype=jnp.float32) * (C_in ** -0.5)

    fn = jax.jit(bn_conv1x1)
    out = jax.block_until_ready(fn(x, gamma, beta, weight))
    ref = reference(x, gamma, beta, weight)

    assert out.shape == (N, C_out, H, W), out.shape
    # bf16 MXU operands vs f32 reference: tolerance sized for bf16 rounding (K=272).
    max_err = float(jnp.max(jnp.abs(out - ref)))
    assert jnp.allclose(out, ref, atol=3e-2, rtol=3e-2), max_err

    print("KERNEL_OK")
</pallas_src>

<mosaic_0001>
module attributes {stable_mosaic.version = 11 : i64} {
  func.func @bn_conv1x1_kernel(%arg0: memref<49x272xf32, #tpu.memory_space<vmem>>, %arg1: memref<1x272xf32, #tpu.memory_space<vmem>>, %arg2: memref<1x272xf32, #tpu.memory_space<vmem>>, %arg3: memref<272x1664xbf16, #tpu.memory_space<vmem>>, %arg4: memref<49x1664xf32, #tpu.memory_space<vmem>>) attributes {dimension_semantics = [], scalar_prefetch = 0 : i64, scratch_operands = 0 : i64, tpu.core_type = #tpu.core_type<tc>} {
    %c0 = arith.constant 0 : index
    %c0_0 = arith.constant 0 : index
    %0 = vector.load %arg0[%c0, %c0_0] : memref<49x272xf32, #tpu.memory_space<vmem>>, vector<49x272xf32>
    %cst = arith.constant dense<0.000000e+00> : vector<272xf32>
    %1 = vector.multi_reduction <add>, %0, %cst [0] : vector<49x272xf32> to vector<272xf32>
    %2 = vector.shape_cast %1 : vector<272xf32> to vector<1x272xf32>
    %cst_1 = arith.constant 0.0204081628 : f32
    %3 = vector.broadcast %cst_1 : f32 to vector<1x272xf32>
    %4 = arith.mulf %2, %3 : vector<1x272xf32>
    %5 = arith.mulf %0, %0 : vector<49x272xf32>
    %cst_2 = arith.constant dense<0.000000e+00> : vector<272xf32>
    %6 = vector.multi_reduction <add>, %5, %cst_2 [0] : vector<49x272xf32> to vector<272xf32>
    %7 = vector.shape_cast %6 : vector<272xf32> to vector<1x272xf32>
    %cst_3 = arith.constant 0.0204081628 : f32
    %8 = vector.broadcast %cst_3 : f32 to vector<1x272xf32>
    %9 = arith.mulf %7, %8 : vector<1x272xf32>
    %10 = arith.mulf %4, %4 : vector<1x272xf32>
    %11 = arith.subf %9, %10 : vector<1x272xf32>
    %cst_4 = arith.constant 0.000000e+00 : f32
    %12 = vector.broadcast %cst_4 : f32 to vector<1x272xf32>
    %13 = arith.maximumf %11, %12 : vector<1x272xf32>
    %cst_5 = arith.constant 9.99999974E-6 : f32
    %14 = vector.broadcast %cst_5 : f32 to vector<1x272xf32>
    %15 = arith.addf %13, %14 : vector<1x272xf32>
    %16 = math.rsqrt %15 : vector<1x272xf32>
    %c0_6 = arith.constant 0 : index
    %c0_7 = arith.constant 0 : index
    %17 = vector.load %arg1[%c0_6, %c0_7] : memref<1x272xf32, #tpu.memory_space<vmem>>, vector<1x272xf32>
    %18 = arith.mulf %16, %17 : vector<1x272xf32>
    %c0_8 = arith.constant 0 : index
    %c0_9 = arith.constant 0 : index
    %19 = vector.load %arg2[%c0_8, %c0_9] : memref<1x272xf32, #tpu.memory_space<vmem>>, vector<1x272xf32>
    %20 = arith.mulf %4, %18 : vector<1x272xf32>
    %21 = arith.subf %19, %20 : vector<1x272xf32>
    %22 = vector.broadcast %18 : vector<1x272xf32> to vector<49x272xf32>
    %23 = arith.mulf %0, %22 : vector<49x272xf32>
    %24 = vector.broadcast %21 : vector<1x272xf32> to vector<49x272xf32>
    %25 = arith.addf %23, %24 : vector<49x272xf32>
    %26 = arith.truncf %25 : vector<49x272xf32> to vector<49x272xbf16>
    %c0_10 = arith.constant 0 : index
    %c0_11 = arith.constant 0 : index
    %27 = vector.load %arg3[%c0_10, %c0_11] : memref<272x1664xbf16, #tpu.memory_space<vmem>>, vector<272x1664xbf16>
    %cst_12 = arith.constant dense<0.000000e+00> : vector<49x1664xf32>
    %28 = tpu.matmul %26, %27, %cst_12 {dimension_numbers = #tpu.dot_dimension_numbers<[1], [0], [0], [1], [0, 0, 1, 1], [], []>} : vector<49x272xbf16>, vector<272x1664xbf16>, vector<49x1664xf32> -> vector<49x1664xf32>
    %c0_13 = arith.constant 0 : index
    %c0_14 = arith.constant 0 : index
    %29 = vector.load %arg4[%c0_13, %c0_14] : memref<49x1664xf32, #tpu.memory_space<vmem>>, vector<49x1664xf32>
    tpu.vector_store %arg4[%c0_13, %c0_14], %28 {strides = array<i32>} : memref<49x1664xf32, #tpu.memory_space<vmem>>, vector<49x1664xf32>,
    return
  }
}

</mosaic_0001>

<llo_original>
// kernel: bn_conv1x1.1
$region0: #{bn_conv1x1.1}
  #allocation0 [shape = 'u32[]', space=smem, size = 0x4, offset = 0x4, fixed_abs, tag = 'smem constant byte address 0x4 - core index']
  #allocation1 [shape = 'u32[144,128]{1,0:T(1,128)}', space=vmem, size = 0x12000, scoped, tag = 'internal scratch']
  %s0 = inlined_call_operand.vmem [shape: f32[49,272], index: 0, kind: input, shape index: {}]
  %s1 = inlined_call_operand.vmem [shape: f32[1,272], index: 1, kind: input, shape index: {}]
  %s2 = inlined_call_operand.vmem [shape: f32[1,272], index: 2, kind: input, shape index: {}]
  %s3 = inlined_call_operand.vmem [shape: bf16[272,1664], index: 3, kind: input, shape index: {}]
  %s4 = inlined_call_operand.vmem [shape: f32[49,1664], index: 4, kind: output, shape index: {}]
  %s5 = sld [smem:[#allocation0]]
  $region26: #{bn_conv1x1.1} parent=0
    _
  %s7 = ssub.s32 1, %s5
  %s8 = scalar_select 0, %s7, %s5
  // Predicated region
  $region2: #{bn_conv1x1.1} parent=0 // pred_check
    _
  $region3: #{bn_conv1x1.1} parent=0 // pred_check_branch
    %10 = sbr.rel (0) target = $region5
  $region4: #{bn_conv1x1.1} parent=0 // pred_region
    _
  $region5: #{bn_conv1x1.1} parent=0 // pred_fallthru
    _
  // Predicated region
  $region6: #{bn_conv1x1.1} parent=0 // pred_check
    _
  $region7: #{bn_conv1x1.1} parent=0 // pred_check_branch
    %12 = sbr.rel (0) target = $region9
  $region8: #{bn_conv1x1.1} parent=0 // pred_region
    _
  $region9: #{bn_conv1x1.1} parent=0 // pred_fallthru
    _
  // Predicated region
  $region10: #{bn_conv1x1.1} parent=0 // pred_check
    _
  $region11: #{bn_conv1x1.1} parent=0 // pred_check_branch
    %14 = sbr.rel (0) target = $region13
  $region12: #{bn_conv1x1.1} parent=0 // pred_region
    _
  $region13: #{bn_conv1x1.1} parent=0 // pred_fallthru
    _
  // Predicated region
  $region14: #{bn_conv1x1.1} parent=0 // pred_check
    _
  $region15: #{bn_conv1x1.1} parent=0 // pred_check_branch
    %16 = sbr.rel (0) target = $region17
  $region16: #{bn_conv1x1.1} parent=0 // pred_region
    _
  $region17: #{bn_conv1x1.1} parent=0 // pred_fallthru
    _
  %v18 = vld [vmem:[%s0] sm:$0xff]
  %v19 = vld [vmem:[%s0 + $0x8] sm:$0xff]
  %v20 = vld [vmem:[%s0 + $0x10] sm:$0xff]
  %v21 = vld [vmem:[%s0 + $0x18] sm:$0xff]
  %v22 = vld [vmem:[%s0 + $0x20] sm:$0xff]
  %v23 = vld [vmem:[%s0 + $0x28] sm:$0xff]
  %v24 = vld [vmem:[%s0 + $0x30] sm:$0xff]
  %v25 = vld [vmem:[%s0 + $0x38] sm:$0xff]
  %v26 = vld [vmem:[%s0 + $0x40] sm:$0xff]
  %v27 = vld [vmem:[%s0 + $0x48] sm:$0xff]
  %v28 = vld [vmem:[%s0 + $0x50] sm:$0xff]
  %v29 = vld [vmem:[%s0 + $0x58] sm:$0xff]
  %v30 = vld [vmem:[%s0 + $0x60] sm:$0xff]
  %v31 = vld [vmem:[%s0 + $0x68] sm:$0xff]
  %v32 = vld [vmem:[%s0 + $0x70] sm:$0xff]
  %v33 = vld [vmem:[%s0 + $0x78] sm:$0xff]
  %v34 = vld [vmem:[%s0 + $0x80] sm:$0xff]
  %v35 = vld [vmem:[%s0 + $0x88] sm:$0xff]
  %v36 = vld [vmem:[%s0 + $0x90] sm:$0x1]
  %v37 = vld [vmem:[%s0 + $0x98] sm:$0x1]
  %v38 = vld [vmem:[%s0 + $0xa0] sm:$0x1]
  %v39 = vadd.f32 %v18, %v21
  %v40 = vadd.f32 %v39, %v24
  %v41 = vadd.f32 %v40, %v27
  %v42 = vadd.f32 %v41, %v30
  %v43 = vadd.f32 %v42, %v33
  %vm44 = vcmask 1040384
  %v45 = vsel %vm44, %v36, 0.0
  %v46 = vadd.f32 %v43, %v45
  %v47 = vrot.slane %v46, 4
  %v48 = vadd.f32 %v46, %v47
  %v49 = vrot.slane %v48, 2
  %v50 = vadd.f32 %v48, %v49
  %v51 = vrot.slane %v50, 1
  %v52 = vadd.f32 %v50, %v51
  %v53 = vadd.f32 %v19, %v22
  %v54 = vadd.f32 %v53, %v25
  %v55 = vadd.f32 %v54, %v28
  %v56 = vadd.f32 %v55, %v31
  %v57 = vadd.f32 %v56, %v34
  %v58 = vsel %vm44, %v37, 0.0
  %v59 = vadd.f32 %v57, %v58
  %v60 = vrot.slane %v59, 4
  %v61 = vadd.f32 %v59, %v60
  %v62 = vrot.slane %v61, 2
  %v63 = vadd.f32 %v61, %v62
  %v64 = vrot.slane %v63, 1
  %v65 = vadd.f32 %v63, %v64
  %vm66 = vcmask 130048
  %v67 = vsel %vm66, %v20, 0.0
  %v68 = vsel %vm66, %v23, 0.0
  %v69 = vadd.f32 %v67, %v68
  %v70 = vsel %vm66, %v26, 0.0
  %v71 = vadd.f32 %v69, %v70
  %v72 = vsel %vm66, %v29, 0.0
  %v73 = vadd.f32 %v71, %v72
  %v74 = vsel %vm66, %v32, 0.0
  %v75 = vadd.f32 %v73, %v74
  %v76 = vsel %vm66, %v35, 0.0
  %v77 = vadd.f32 %v75, %v76
  %vm78 = vcmask 122880
  %v79 = vsel %vm78, %v38, 0.0
  %v80 = vadd.f32 %v77, %v79
  %v81 = vrot.slane %v80, 4
  %v82 = vadd.f32 %v80, %v81
  %v83 = vrot.slane %v82, 2
  %v84 = vadd.f32 %v82, %v83
  %v85 = vrot.slane %v84, 1
  %v86 = vadd.f32 %v84, %v85
  %v87 = vmul.f32 %v52, 0.020408163
  %v88 = vmul.f32 %v65, 0.020408163
  %v89 = vmul.f32 %v86, 0.020408163
  %v90 = vmul.f32 %v18, %v18
  %v91 = vmul.f32 %v19, %v19
  %v92 = vmul.f32 %v20, %v20
  %v93 = vmul.f32 %v21, %v21
  %v94 = vmul.f32 %v22, %v22
  %v95 = vmul.f32 %v23, %v23
  %v96 = vmul.f32 %v24, %v24
  %v97 = vmul.f32 %v25, %v25
  %v98 = vmul.f32 %v26, %v26
  %v99 = vmul.f32 %v27, %v27
  %v100 = vmul.f32 %v28, %v28
  %v101 = vmul.f32 %v29, %v29
  %v102 = vmul.f32 %v30, %v30
  %v103 = vmul.f32 %v31, %v31
  %v104 = vmul.f32 %v32, %v32
  %v105 = vmul.f32 %v33, %v33
  %v106 = vmul.f32 %v34, %v34
  %v107 = vmul.f32 %v35, %v35
  %v108 = vmul.f32 %v36, %v36
  %v109 = vmul.f32 %v37, %v37
  %v110 = vmul.f32 %v38, %v38
  %v111 = vadd.f32 %v90, %v93
  %v112 = vadd.f32 %v111, %v96
  %v113 = vadd.f32 %v112, %v99
  %v114 = vadd.f32 %v113, %v102
  %v115 = vadd.f32 %v114, %v105
  %v116 = vsel %vm44, %v108, 0.0
  %v117 = vadd.f32 %v115, %v116
  %v118 = vrot.slane %v117, 4
  %v119 = vadd.f32 %v117, %v118
  %v120 = vrot.slane %v119, 2
  %v121 = vadd.f32 %v119, %v120
  %v122 = vrot.slane %v121, 1
  %v123 = vadd.f32 %v121, %v122
  %v124 = vadd.f32 %v91, %v94
  %v125 = vadd.f32 %v124, %v97
  %v126 = vadd.f32 %v125, %v100
  %v127 = vadd.f32 %v126, %v103
  %v128 = vadd.f32 %v127, %v106
  %v129 = vsel %vm44, %v109, 0.0
  %v130 = vadd.f32 %v128, %v129
  %v131 = vrot.slane %v130, 4
  %v132 = vadd.f32 %v130, %v131
  %v133 = vrot.slane %v132, 2
  %v134 = vadd.f32 %v132, %v133
  %v135 = vrot.slane %v134, 1
  %v136 = vadd.f32 %v134, %v135
  %v137 = vsel %vm66, %v92, 0.0
  %v138 = vsel %vm66, %v95, 0.0
  %v139 = vadd.f32 %v137, %v138
  %v140 = vsel %vm66, %v98, 0.0
  %v141 = vadd.f32 %v139, %v140
  %v142 = vsel %vm66, %v101, 0.0
  %v143 = vadd.f32 %v141, %v142
  %v144 = vsel %vm66, %v104, 0.0
  %v145 = vadd.f32 %v143, %v144
  %v146 = vsel %vm66, %v107, 0.0
  %v147 = vadd.f32 %v145, %v146
  %v148 = vsel %vm78, %v110, 0.0
  %v149 = vadd.f32 %v147, %v148
  %v150 = vrot.slane %v149, 4
  %v151 = vadd.f32 %v149, %v150
  %v152 = vrot.slane %v151, 2
  %v153 = vadd.f32 %v151, %v152
  %v154 = vrot.slane %v153, 1
  %v155 = vadd.f32 %v153, %v154
  %v156 = vmul.f32 %v123, 0.020408163
  %v157 = vmul.f32 %v136, 0.020408163
  %v158 = vmul.f32 %v155, 0.020408163
  %v159 = vmul.f32 %v87, %v87
  %v160 = vmul.f32 %v88, %v88
  %v161 = vmul.f32 %v89, %v89
  %v162 = vsub.f32 %v156, %v159
  %v163 = vsub.f32 %v157, %v160
  %v164 = vsub.f32 %v158, %v161
  %v165 = vmax.f32 %v162, 0.0
  %v166 = vmax.f32 %v163, 0.0
  %v167 = vmax.f32 %v164, 0.0
  %v168 = vadd.f32 %v165, 1e-05
  %v169 = vadd.f32 %v166, 1e-05
  %v170 = vadd.f32 %v167, 1e-05
  %v171 = vrsqrt.pop %v168
  %v172 = vrsqrt.pop %v169
  %v173 = vrsqrt.pop %v170
  %v174 = vld [vmem:[%s1] sm:$0x7]
  %v176 = vlaneseq
  %v177 = vshrl.u32 %v176, 7
  %v178 = vsub.s32 0, %v177
  %v179 = vrot.slane %v174, %v178
  %v180 = vlaneseq
  %v181 = vshrl.u32 %v180, 7
  %v182 = vsub.s32 1, %v181
  %v183 = vrot.slane %v174, %v182
  %v184 = vlaneseq
  %v185 = vshrl.u32 %v184, 7
  %v186 = vsub.s32 2, %v185
  %v187 = vrot.slane %v174, %v186
  %v191 = vmul.f32 %v171, %v179
  %v192 = vmul.f32 %v172, %v183
  %v193 = vmul.f32 %v173, %v187
  %v194 = vld [vmem:[%s2] sm:$0x7]
  %v195 = vmul.f32 %v87, %v191
  %v196 = vmul.f32 %v88, %v192
  %v197 = vmul.f32 %v89, %v193
  %v201 = vcombine.low %v195, %v196
  %v203 = vunpack.c.l.s4 1966171168
  %v204 = vunpack.c.0.s8 %v203
  %v205 = vlaneseq
  %v206 = vshrl.u32 %v205, 7
  %v207 = vsub.s32 %v204, %v206
  %v208 = vrot.slane %v201, %v207
  %v210 = vunpack.c.l.s4 1966171168
  %v211 = vunpack.c.0.s8 %v210
  %v212 = vlaneseq
  %v213 = vshrl.u32 %v212, 7
  %v214 = vsub.s32 %v211, %v213
  %v215 = vrot.slane %v197, %v214
  %v216 = vcombine.low %v208, %v215
  %v218 = vunpack.c.l.s4 1966171168
  %v219 = vunpack.c.0.s8 %v218
  %v220 = vlaneseq
  %v221 = vshrl.u32 %v220, 7
  %v222 = vsub.s32 %v219, %v221
  %v223 = vrot.slane %v216, %v222
  %v225 = vsub.f32 %v194, %v223
  %v226 = vlaneseq
  %v227 = vshrl.u32 %v226, 7
  %v228 = vsub.s32 0, %v227
  %v229 = vrot.slane %v191, %v228
  %v230 = vlaneseq
  %v231 = vshrl.u32 %v230, 7
  %v232 = vsub.s32 0, %v231
  %v233 = vrot.slane %v192, %v232
  %v234 = vlaneseq
  %v235 = vshrl.u32 %v234, 7
  %v236 = vsub.s32 0, %v235
  %v237 = vrot.slane %v193, %v236
  %v238 = vmul.f32 %v18, %v229
  %v239 = vmul.f32 %v19, %v233
  %v240 = vmul.f32 %v20, %v237
  %v241 = vmul.f32 %v21, %v229
  %v242 = vmul.f32 %v22, %v233
  %v243 = vmul.f32 %v23, %v237
  %v244 = vmul.f32 %v24, %v229
  %v245 = vmul.f32 %v25, %v233
  %v246 = vmul.f32 %v26, %v237
  %v247 = vmul.f32 %v27, %v229
  %v248 = vmul.f32 %v28, %v233
  %v249 = vmul.f32 %v29, %v237
  %v250 = vmul.f32 %v30, %v229
  %v251 = vmul.f32 %v31, %v233
  %v252 = vmul.f32 %v32, %v237
  %v253 = vmul.f32 %v33, %v229
  %v254 = vmul.f32 %v34, %v233
  %v255 = vmul.f32 %v35, %v237
  %v256 = vmul.f32 %v36, %v229
  %v257 = vmul.f32 %v37, %v233
  %v258 = vmul.f32 %v38, %v237
  %v260 = vlaneseq
  %v261 = vshrl.u32 %v260, 7
  %v262 = vsub.s32 0, %v261
  %v263 = vrot.slane %v225, %v262
  %v264 = vlaneseq
  %v265 = vshrl.u32 %v264, 7
  %v266 = vsub.s32 1, %v265
  %v267 = vrot.slane %v225, %v266
  %v268 = vlaneseq
  %v269 = vshrl.u32 %v268, 7
  %v270 = vsub.s32 2, %v269
  %v271 = vrot.slane %v225, %v270
  %v275 = vadd.f32 %v238, %v263
  %v276 = vadd.f32 %v239, %v267
  %v277 = vadd.f32 %v240, %v271
  %v278 = vadd.f32 %v241, %v263
  %v279 = vadd.f32 %v242, %v267
  %v280 = vadd.f32 %v243, %v271
  %v281 = vadd.f32 %v244, %v263
  %v282 = vadd.f32 %v245, %v267
  %v283 = vadd.f32 %v246, %v271
  %v284 = vadd.f32 %v247, %v263
  %v285 = vadd.f32 %v248, %v267
  %v286 = vadd.f32 %v249, %v271
  %v287 = vadd.f32 %v250, %v263
  %v288 = vadd.f32 %v251, %v267
  %v289 = vadd.f32 %v252, %v271
  %v290 = vadd.f32 %v253, %v263
  %v291 = vadd.f32 %v254, %v267
  %v292 = vadd.f32 %v255, %v271
  %v293 = vadd.f32 %v256, %v263
  %v294 = vadd.f32 %v257, %v267
  %v295 = vadd.f32 %v258, %v271
  %v296 = vpack.c.bf16 %v278, %v275
  %v297 = vpack.c.bf16 %v279, %v276
  %v298 = vpack.c.bf16 %v280, %v277
  %v299 = vpack.c.bf16 %v284, %v281
  %v300 = vpack.c.bf16 %v285, %v282
  %v301 = vpack.c.bf16 %v286, %v283
  %v302 = vpack.c.bf16 %v290, %v287
  %v303 = vpack.c.bf16 %v291, %v288
  %v304 = vpack.c.bf16 %v292, %v289
  %v305 = vpack.c.bf16 %v293, %v293
  %v306 = vpack.c.bf16 %v294, %v294
  %v307 = vpack.c.bf16 %v295, %v295
  %v308 = vld [vmem:[%s3] sm:$0xff]
  %v309 = vld [vmem:[%s3 + $0x8] sm:$0xff]
  %v310 = vld [vmem:[%s3 + $0x10] sm:$0xff]
  %v311 = vld [vmem:[%s3 + $0x18] sm:$0xff]
  %v312 = vld [vmem:[%s3 + $0x20] sm:$0xff]
  %v313 = vld [vmem:[%s3 + $0x28] sm:$0xff]
  %v314 = vld [vmem:[%s3 + $0x30] sm:$0xf]
  %v315 = vld [vmem:[%s3 + $0x34] sm:$0xff]
  %v316 = vld [vmem:[%s3 + $0x3c] sm:$0xff]
  %v317 = vld [vmem:[%s3 + $0x44] sm:$0xff]
  %v318 = vld [vmem:[%s3 + $0x4c] sm:$0xff]
  %v319 = vld [vmem:[%s3 + $0x54] sm:$0xff]
  %v320 = vld [vmem:[%s3 + $0x5c] sm:$0xff]
  %v321 = vld [vmem:[%s3 + $0x64] sm:$0xf]
  %v322 = vld [vmem:[%s3 + $0x68] sm:$0xff]
  %v323 = vld [vmem:[%s3 + $0x70] sm:$0xff]
  %v324 = vld [vmem:[%s3 + $0x78] sm:$0xff]
  %v325 = vld [vmem:[%s3 + $0x80] sm:$0xff]
  %v326 = vld [vmem:[%s3 + $0x88] sm:$0xff]
  %v327 = vld [vmem:[%s3 + $0x90] sm:$0xff]
  %v328 = vld [vmem:[%s3 + $0x98] sm:$0xf]
  %v329 = vld [vmem:[%s3 + $0x9c] sm:$0xff]
  %v330 = vld [vmem:[%s3 + $0xa4] sm:$0xff]
  %v331 = vld [vmem:[%s3 + $0xac] sm:$0xff]
  %v332 = vld [vmem:[%s3 + $0xb4] sm:$0xff]
  %v333 = vld [vmem:[%s3 + $0xbc] sm:$0xff]
  %v334 = vld [vmem:[%s3 + $0xc4] sm:$0xff]
  %v335 = vld [vmem:[%s3 + $0xcc] sm:$0xf]
  %v336 = vld [vmem:[%s3 + $0xd0] sm:$0xff]
  %v337 = vld [vmem:[%s3 + $0xd8] sm:$0xff]
  %v338 = vld [vmem:[%s3 + $0xe0] sm:$0xff]
  %v339 = vld [vmem:[%s3 + $0xe8] sm:$0xff]
  %v340 = vld [vmem:[%s3 + $0xf0] sm:$0xff]
  %v341 = vld [vmem:[%s3 + $0xf8] sm:$0xff]
  %v342 = vld [vmem:[%s3 + $0x100] sm:$0xf]
  %v343 = vld [vmem:[%s3 + $0x104] sm:$0xff]
  %v344 = vld [vmem:[%s3 + $0x10c] sm:$0xff]
  %v345 = vld [vmem:[%s3 + $0x114] sm:$0xff]
  %v346 = vld [vmem:[%s3 + $0x11c] sm:$0xff]
  %v347 = vld [vmem:[%s3 + $0x124] sm:$0xff]
  %v348 = vld [vmem:[%s3 + $0x12c] sm:$0xff]
  %v349 = vld [vmem:[%s3 + $0x134] sm:$0xf]
  %v350 = vld [vmem:[%s3 + $0x138] sm:$0xff]
  %v351 = vld [vmem:[%s3 + $0x140] sm:$0xff]
  %v352 = vld [vmem:[%s3 + $0x148] sm:$0xff]
  %v353 = vld [vmem:[%s3 + $0x150] sm:$0xff]
  %v354 = vld [vmem:[%s3 + $0x158] sm:$0xff]
  %v355 = vld [vmem:[%s3 + $0x160] sm:$0xff]
  %v356 = vld [vmem:[%s3 + $0x168] sm:$0xf]
  %v357 = vld [vmem:[%s3 + $0x16c] sm:$0xff]
  %v358 = vld [vmem:[%s3 + $0x174] sm:$0xff]
  %v359 = vld [vmem:[%s3 + $0x17c] sm:$0xff]
  %v360 = vld [vmem:[%s3 + $0x184] sm:$0xff]
  %v361 = vld [vmem:[%s3 + $0x18c] sm:$0xff]
  %v362 = vld [vmem:[%s3 + $0x194] sm:$0xff]
  %v363 = vld [vmem:[%s3 + $0x19c] sm:$0xf]
  %v364 = vld [vmem:[%s3 + $0x1a0] sm:$0xff]
  %v365 = vld [vmem:[%s3 + $0x1a8] sm:$0xff]
  %v366 = vld [vmem:[%s3 + $0x1b0] sm:$0xff]
  %v367 = vld [vmem:[%s3 + $0x1b8] sm:$0xff]
  %v368 = vld [vmem:[%s3 + $0x1c0] sm:$0xff]
  %v369 = vld [vmem:[%s3 + $0x1c8] sm:$0xff]
  %v370 = vld [vmem:[%s3 + $0x1d0] sm:$0xf]
  %v371 = vld [vmem:[%s3 + $0x1d4] sm:$0xff]
  %v372 = vld [vmem:[%s3 + $0x1dc] sm:$0xff]
  %v373 = vld [vmem:[%s3 + $0x1e4] sm:$0xff]
  %v374 = vld [vmem:[%s3 + $0x1ec] sm:$0xff]
  %v375 = vld [vmem:[%s3 + $0x1f4] sm:$0xff]
  %v376 = vld [vmem:[%s3 + $0x1fc] sm:$0xff]
  %v377 = vld [vmem:[%s3 + $0x204] sm:$0xf]
  %v378 = vld [vmem:[%s3 + $0x208] sm:$0xff]
  %v379 = vld [vmem:[%s3 + $0x210] sm:$0xff]
  %v380 = vld [vmem:[%s3 + $0x218] sm:$0xff]
  %v381 = vld [vmem:[%s3 + $0x220] sm:$0xff]
  %v382 = vld [vmem:[%s3 + $0x228] sm:$0xff]
  %v383 = vld [vmem:[%s3 + $0x230] sm:$0xff]
  %v384 = vld [vmem:[%s3 + $0x238] sm:$0xf]
  %v385 = vld [vmem:[%s3 + $0x23c] sm:$0xff]
  %v386 = vld [vmem:[%s3 + $0x244] sm:$0xff]
  %v387 = vld [vmem:[%s3 + $0x24c] sm:$0xff]
  %v388 = vld [vmem:[%s3 + $0x254] sm:$0xff]
  %v389 = vld [vmem:[%s3 + $0x25c] sm:$0xff]
  %v390 = vld [vmem:[%s3 + $0x264] sm:$0xff]
  %v391 = vld [vmem:[%s3 + $0x26c] sm:$0xf]
  %v392 = vld [vmem:[%s3 + $0x270] sm:$0xff]
  %v393 = vld [vmem:[%s3 + $0x278] sm:$0xff]
  %v394 = vld [vmem:[%s3 + $0x280] sm:$0xff]
  %v395 = vld [vmem:[%s3 + $0x288] sm:$0xff]
  %v396 = vld [vmem:[%s3 + $0x290] sm:$0xff]
  %v397 = vld [vmem:[%s3 + $0x298] sm:$0xff]
  %v398 = vld [vmem:[%s3 + $0x2a0] sm:$0xf]
  %v399 = vld [vmem:[%s3 + $0x2a4] sm:$0xff]
  %v400 = vld [vmem:[%s3 + $0x2ac] sm:$0xff]
  %v401 = vld [vmem:[%s3 + $0x2b4] sm:$0xff]
  %v402 = vld [vmem:[%s3 + $0x2bc] sm:$0xff]
  %v403 = vld [vmem:[%s3 + $0x2c4] sm:$0xff]
  %v404 = vld [vmem:[%s3 + $0x2cc] sm:$0xff]
  %v405 = vld [vmem:[%s3 + $0x2d4] sm:$0xf]
  %v406 = vld [vmem:[%s3 + $0x2d8] sm:$0xff]
  %v407 = vld [vmem:[%s3 + $0x2e0] sm:$0xff]
  %v408 = vld [vmem:[%s3 + $0x2e8] sm:$0xff]
  %v409 = vld [vmem:[%s3 + $0x2f0] sm:$0xff]
  %v410 = vld [vmem:[%s3 + $0x2f8] sm:$0xff]
  %v411 = vld [vmem:[%s3 + $0x300] sm:$0xff]
  %v412 = vld [vmem:[%s3 + $0x308] sm:$0xf]
  %v413 = vld [vmem:[%s3 + $0x30c] sm:$0xff]
  %v414 = vld [vmem:[%s3 + $0x314] sm:$0xff]
  %v415 = vld [vmem:[%s3 + $0x31c] sm:$0xff]
  %v416 = vld [vmem:[%s3 + $0x324] sm:$0xff]
  %v417 = vld [vmem:[%s3 + $0x32c] sm:$0xff]
  %v418 = vld [vmem:[%s3 + $0x334] sm:$0xff]
  %v419 = vld [vmem:[%s3 + $0x33c] sm:$0xf]
  %v420 = vld [vmem:[%s3 + $0x340] sm:$0xff]
  %v421 = vld [vmem:[%s3 + $0x348] sm:$0xff]
  %v422 = vld [vmem:[%s3 + $0x350] sm:$0xff]
  %v423 = vld [vmem:[%s3 + $0x358] sm:$0xff]
  %v424 = vld [vmem:[%s3 + $0x360] sm:$0xff]
  %v425 = vld [vmem:[%s3 + $0x368] sm:$0xff]
  %v426 = vld [vmem:[%s3 + $0x370] sm:$0xf]
  %v427 = vld [vmem:[%s3 + $0x374] sm:$0xff]
  %v428 = vld [vmem:[%s3 + $0x37c] sm:$0xff]
  %v429 = vld [vmem:[%s3 + $0x384] sm:$0xff]
  %v430 = vld [vmem:[%s3 + $0x38c] sm:$0xff]
  %v431 = vld [vmem:[%s3 + $0x394] sm:$0xff]
  %v432 = vld [vmem:[%s3 + $0x39c] sm:$0xff]
  %v433 = vld [vmem:[%s3 + $0x3a4] sm:$0xf]
  %v434 = vld [vmem:[%s3 + $0x3a8] sm:$0xff]
  %v435 = vld [vmem:[%s3 + $0x3b0] sm:$0xff]
  %v436 = vld [vmem:[%s3 + $0x3b8] sm:$0xff]
  %v437 = vld [vmem:[%s3 + $0x3c0] sm:$0xff]
  %v438 = vld [vmem:[%s3 + $0x3c8] sm:$0xff]
  %v439 = vld [vmem:[%s3 + $0x3d0] sm:$0xff]
  %v440 = vld [vmem:[%s3 + $0x3d8] sm:$0xf]
  %v441 = vld [vmem:[%s3 + $0x3dc] sm:$0xff]
  %v442 = vld [vmem:[%s3 + $0x3e4] sm:$0xff]
  %v443 = vld [vmem:[%s3 + $0x3ec] sm:$0xff]
  %v444 = vld [vmem:[%s3 + $0x3f4] sm:$0xff]
  %v445 = vld [vmem:[%s3 + $0x3fc] sm:$0xff]
  %v446 = vld [vmem:[%s3 + $0x404] sm:$0xff]
  %v447 = vld [vmem:[%s3 + $0x40c] sm:$0xf]
  %v448 = vld [vmem:[%s3 + $0x410] sm:$0xff]
  %v449 = vld [vmem:[%s3 + $0x418] sm:$0xff]
  %v450 = vld [vmem:[%s3 + $0x420] sm:$0xff]
  %v451 = vld [vmem:[%s3 + $0x428] sm:$0xff]
  %v452 = vld [vmem:[%s3 + $0x430] sm:$0xff]
  %v453 = vld [vmem:[%s3 + $0x438] sm:$0xff]
  %v454 = vld [vmem:[%s3 + $0x440] sm:$0xf]
  %v455 = vld [vmem:[%s3 + $0x444] sm:$0xff]
  %v456 = vld [vmem:[%s3 + $0x44c] sm:$0xff]
  %v457 = vld [vmem:[%s3 + $0x454] sm:$0xff]
  %v458 = vld [vmem:[%s3 + $0x45c] sm:$0xff]
  %v459 = vld [vmem:[%s3 + $0x464] sm:$0xff]
  %v460 = vld [vmem:[%s3 + $0x46c] sm:$0xff]
  %v461 = vld [vmem:[%s3 + $0x474] sm:$0xf]
  %v462 = vld [vmem:[%s3 + $0x478] sm:$0xff]
  %v463 = vld [vmem:[%s3 + $0x480] sm:$0xff]
  %v464 = vld [vmem:[%s3 + $0x488] sm:$0xff]
  %v465 = vld [vmem:[%s3 + $0x490] sm:$0xff]
  %v466 = vld [vmem:[%s3 + $0x498] sm:$0xff]
  %v467 = vld [vmem:[%s3 + $0x4a0] sm:$0xff]
  %v468 = vld [vmem:[%s3 + $0x4a8] sm:$0xf]
  %v469 = vld [vmem:[%s3 + $0x4ac] sm:$0xff]
  %v470 = vld [vmem:[%s3 + $0x4b4] sm:$0xff]
  %v471 = vld [vmem:[%s3 + $0x4bc] sm:$0xff]
  %v472 = vld [vmem:[%s3 + $0x4c4] sm:$0xff]
  %v473 = vld [vmem:[%s3 + $0x4cc] sm:$0xff]
  %v474 = vld [vmem:[%s3 + $0x4d4] sm:$0xff]
  %v475 = vld [vmem:[%s3 + $0x4dc] sm:$0xf]
  %v476 = vld [vmem:[%s3 + $0x4e0] sm:$0xff]
  %v477 = vld [vmem:[%s3 + $0x4e8] sm:$0xff]
  %v478 = vld [vmem:[%s3 + $0x4f0] sm:$0xff]
  %v479 = vld [vmem:[%s3 + $0x4f8] sm:$0xff]
  %v480 = vld [vmem:[%s3 + $0x500] sm:$0xff]
  %v481 = vld [vmem:[%s3 + $0x508] sm:$0xff]
  %v482 = vld [vmem:[%s3 + $0x510] sm:$0xf]
  %v483 = vld [vmem:[%s3 + $0x514] sm:$0xff]
  %v484 = vld [vmem:[%s3 + $0x51c] sm:$0xff]
  %v485 = vld [vmem:[%s3 + $0x524] sm:$0xff]
  %v486 = vld [vmem:[%s3 + $0x52c] sm:$0xff]
  %v487 = vld [vmem:[%s3 + $0x534] sm:$0xff]
  %v488 = vld [vmem:[%s3 + $0x53c] sm:$0xff]
  %v489 = vld [vmem:[%s3 + $0x544] sm:$0xf]
  %v490 = vld [vmem:[%s3 + $0x548] sm:$0xff]
  %v491 = vld [vmem:[%s3 + $0x550] sm:$0xff]
  %v492 = vld [vmem:[%s3 + $0x558] sm:$0xff]
  %v493 = vld [vmem:[%s3 + $0x560] sm:$0xff]
  %v494 = vld [vmem:[%s3 + $0x568] sm:$0xff]
  %v495 = vld [vmem:[%s3 + $0x570] sm:$0xff]
  %v496 = vld [vmem:[%s3 + $0x578] sm:$0xf]
  %v497 = vld [vmem:[%s3 + $0x57c] sm:$0xff]
  %v498 = vld [vmem:[%s3 + $0x584] sm:$0xff]
  %v499 = vld [vmem:[%s3 + $0x58c] sm:$0xff]
  %v500 = vld [vmem:[%s3 + $0x594] sm:$0xff]
  %v501 = vld [vmem:[%s3 + $0x59c] sm:$0xff]
  %v502 = vld [vmem:[%s3 + $0x5a4] sm:$0xff]
  %v503 = vld [vmem:[%s3 + $0x5ac] sm:$0xf]
  %v504 = vld [vmem:[%s3 + $0x5b0] sm:$0xff]
  %v505 = vld [vmem:[%s3 + $0x5b8] sm:$0xff]
  %v506 = vld [vmem:[%s3 + $0x5c0] sm:$0xff]
  %v507 = vld [vmem:[%s3 + $0x5c8] sm:$0xff]
  %v508 = vld [vmem:[%s3 + $0x5d0] sm:$0xff]
  %v509 = vld [vmem:[%s3 + $0x5d8] sm:$0xff]
  %v510 = vld [vmem:[%s3 + $0x5e0] sm:$0xf]
  %v511 = vld [vmem:[%s3 + $0x5e4] sm:$0xff]
  %v512 = vld [vmem:[%s3 + $0x5ec] sm:$0xff]
  %v513 = vld [vmem:[%s3 + $0x5f4] sm:$0xff]
  %v514 = vld [vmem:[%s3 + $0x5fc] sm:$0xff]
  %v515 = vld [vmem:[%s3 + $0x604] sm:$0xff]
  %v516 = vld [vmem:[%s3 + $0x60c] sm:$0xff]
  %v517 = vld [vmem:[%s3 + $0x614] sm:$0xf]
  %v518 = vld [vmem:[%s3 + $0x618] sm:$0xff]
  %v519 = vld [vmem:[%s3 + $0x620] sm:$0xff]
  %v520 = vld [vmem:[%s3 + $0x628] sm:$0xff]
  %v521 = vld [vmem:[%s3 + $0x630] sm:$0xff]
  %v522 = vld [vmem:[%s3 + $0x638] sm:$0xff]
  %v523 = vld [vmem:[%s3 + $0x640] sm:$0xff]
  %v524 = vld [vmem:[%s3 + $0x648] sm:$0xf]
  %v525 = vld [vmem:[%s3 + $0x64c] sm:$0xff]
  %v526 = vld [vmem:[%s3 + $0x654] sm:$0xff]
  %v527 = vld [vmem:[%s3 + $0x65c] sm:$0xff]
  %v528 = vld [vmem:[%s3 + $0x664] sm:$0xff]
  %v529 = vld [vmem:[%s3 + $0x66c] sm:$0xff]
  %v530 = vld [vmem:[%s3 + $0x674] sm:$0xff]
  %v531 = vld [vmem:[%s3 + $0x67c] sm:$0xf]
  %v532 = vld [vmem:[%s3 + $0x680] sm:$0xff]
  %v533 = vld [vmem:[%s3 + $0x688] sm:$0xff]
  %v534 = vld [vmem:[%s3 + $0x690] sm:$0xff]
  %v535 = vld [vmem:[%s3 + $0x698] sm:$0xff]
  %v536 = vld [vmem:[%s3 + $0x6a0] sm:$0xff]
  %v537 = vld [vmem:[%s3 + $0x6a8] sm:$0xff]
  %v538 = vld [vmem:[%s3 + $0x6b0] sm:$0xf]
  %v539 = vld [vmem:[%s3 + $0x6b4] sm:$0xff]
  %v540 = vld [vmem:[%s3 + $0x6bc] sm:$0xff]
  %v541 = vld [vmem:[%s3 + $0x6c4] sm:$0xff]
  %v542 = vld [vmem:[%s3 + $0x6cc] sm:$0xff]
  %v543 = vld [vmem:[%s3 + $0x6d4] sm:$0xff]
  %v544 = vld [vmem:[%s3 + $0x6dc] sm:$0xff]
  %v545 = vld [vmem:[%s3 + $0x6e4] sm:$0xf]
  %v784 = vunpack.c.l.b16 %v308
  %v785 = vunpack.c.h.b16 %v308
  %v786 = vunpack.c.l.b16 %v309
  %v787 = vunpack.c.h.b16 %v309
  %v788 = vunpack.c.l.b16 %v310
  %v789 = vunpack.c.h.b16 %v310
  %v790 = vunpack.c.l.b16 %v311
  %v791 = vunpack.c.h.b16 %v311
  %v792 = vunpack.c.l.b16 %v312
  %v793 = vunpack.c.h.b16 %v312
  %v794 = vunpack.c.l.b16 %v313
  %v795 = vunpack.c.h.b16 %v313
  %v796 = vunpack.c.l.b16 %v314
  %v797 = vunpack.c.l.b16 %v315
  %v798 = vunpack.c.h.b16 %v315
  %v799 = vunpack.c.l.b16 %v316
  %v800 = vunpack.c.h.b16 %v316
  %v801 = vunpack.c.l.b16 %v317
  %v802 = vunpack.c.h.b16 %v317
  %v803 = vunpack.c.l.b16 %v318
  %v804 = vunpack.c.h.b16 %v318
  %v805 = vunpack.c.l.b16 %v319
  %v806 = vunpack.c.h.b16 %v319
  %v807 = vunpack.c.l.b16 %v320
  %v808 = vunpack.c.h.b16 %v320
  %v809 = vunpack.c.l.b16 %v321
  %v810 = vunpack.c.l.b16 %v322
  %v811 = vunpack.c.h.b16 %v322
  %v812 = vunpack.c.l.b16 %v323
  %v813 = vunpack.c.h.b16 %v323
  %v814 = vunpack.c.l.b16 %v324
  %v815 = vunpack.c.h.b16 %v324
  %v816 = vunpack.c.l.b16 %v325
  %v817 = vunpack.c.h.b16 %v325
  %v818 = vunpack.c.l.b16 %v326
  %v819 = vunpack.c.h.b16 %v326
  %v820 = vunpack.c.l.b16 %v327
  %v821 = vunpack.c.h.b16 %v327
  %v822 = vunpack.c.l.b16 %v328
  %v823 = vunpack.c.l.b16 %v329
  %v824 = vunpack.c.h.b16 %v329
  %v825 = vunpack.c.l.b16 %v330
  %v826 = vunpack.c.h.b16 %v330
  %v827 = vunpack.c.l.b16 %v331
  %v828 = vunpack.c.h.b16 %v331
  %v829 = vunpack.c.l.b16 %v332
  %v830 = vunpack.c.h.b16 %v332
  %v831 = vunpack.c.l.b16 %v333
  %v832 = vunpack.c.h.b16 %v333
  %v833 = vunpack.c.l.b16 %v334
  %v834 = vunpack.c.h.b16 %v334
  %v835 = vunpack.c.l.b16 %v335
  %v836 = vunpack.c.l.b16 %v336
  %v837 = vunpack.c.h.b16 %v336
  %v838 = vunpack.c.l.b16 %v337
  %v839 = vunpack.c.h.b16 %v337
  %v840 = vunpack.c.l.b16 %v338
  %v841 = vunpack.c.h.b16 %v338
  %v842 = vunpack.c.l.b16 %v339
  %v843 = vunpack.c.h.b16 %v339
  %v844 = vunpack.c.l.b16 %v340
  %v845 = vunpack.c.h.b16 %v340
  %v846 = vunpack.c.l.b16 %v341
  %v847 = vunpack.c.h.b16 %v341
  %v848 = vunpack.c.l.b16 %v342
  %v849 = vunpack.c.l.b16 %v343
  %v850 = vunpack.c.h.b16 %v343
  %v851 = vunpack.c.l.b16 %v344
  %v852 = vunpack.c.h.b16 %v344
  %v853 = vunpack.c.l.b16 %v345
  %v854 = vunpack.c.h.b16 %v345
  %v855 = vunpack.c.l.b16 %v346
  %v856 = vunpack.c.h.b16 %v346
  %v857 = vunpack.c.l.b16 %v347
  %v858 = vunpack.c.h.b16 %v347
  %v859 = vunpack.c.l.b16 %v348
  %v860 = vunpack.c.h.b16 %v348
  %v861 = vunpack.c.l.b16 %v349
  %v862 = vunpack.c.l.b16 %v350
  %v863 = vunpack.c.h.b16 %v350
  %v864 = vunpack.c.l.b16 %v351
  %v865 = vunpack.c.h.b16 %v351
  %v866 = vunpack.c.l.b16 %v352
  %v867 = vunpack.c.h.b16 %v352
  %v868 = vunpack.c.l.b16 %v353
  %v869 = vunpack.c.h.b16 %v353
  %v870 = vunpack.c.l.b16 %v354
  %v871 = vunpack.c.h.b16 %v354
  %v872 = vunpack.c.l.b16 %v355
  %v873 = vunpack.c.h.b16 %v355
  %v874 = vunpack.c.l.b16 %v356
  %v875 = vunpack.c.l.b16 %v357
  %v876 = vunpack.c.h.b16 %v357
  %v877 = vunpack.c.l.b16 %v358
  %v878 = vunpack.c.h.b16 %v358
  %v879 = vunpack.c.l.b16 %v359
  %v880 = vunpack.c.h.b16 %v359
  %v881 = vunpack.c.l.b16 %v360
  %v882 = vunpack.c.h.b16 %v360
  %v883 = vunpack.c.l.b16 %v361
  %v884 = vunpack.c.h.b16 %v361
  %v885 = vunpack.c.l.b16 %v362
  %v886 = vunpack.c.h.b16 %v362
  %v887 = vunpack.c.l.b16 %v363
  %v888 = vunpack.c.l.b16 %v364
  %v889 = vunpack.c.h.b16 %v364
  %v890 = vunpack.c.l.b16 %v365
  %v891 = vunpack.c.h.b16 %v365
  %v892 = vunpack.c.l.b16 %v366
  %v893 = vunpack.c.h.b16 %v366
  %v894 = vunpack.c.l.b16 %v367
  %v895 = vunpack.c.h.b16 %v367
  %v896 = vunpack.c.l.b16 %v368
  %v897 = vunpack.c.h.b16 %v368
  %v898 = vunpack.c.l.b16 %v369
  %v899 = vunpack.c.h.b16 %v369
  %v900 = vunpack.c.l.b16 %v370
  %v901 = vunpack.c.l.b16 %v371
  %v902 = vunpack.c.h.b16 %v371
  %v903 = vunpack.c.l.b16 %v372
  %v904 = vunpack.c.h.b16 %v372
  %v905 = vunpack.c.l.b16 %v373
  %v906 = vunpack.c.h.b16 %v373
  %v907 = vunpack.c.l.b16 %v374
  %v908 = vunpack.c.h.b16 %v374
  %v909 = vunpack.c.l.b16 %v375
  %v910 = vunpack.c.h.b16 %v375
  %v911 = vunpack.c.l.b16 %v376
  %v912 = vunpack.c.h.b16 %v376
  %v913 = vunpack.c.l.b16 %v377
  %v914 = vunpack.c.l.b16 %v378
  %v915 = vunpack.c.h.b16 %v378
  %v916 = vunpack.c.l.b16 %v379
  %v917 = vunpack.c.h.b16 %v379
  %v918 = vunpack.c.l.b16 %v380
  %v919 = vunpack.c.h.b16 %v380
  %v920 = vunpack.c.l.b16 %v381
  %v921 = vunpack.c.h.b16 %v381
  %v922 = vunpack.c.l.b16 %v382
  %v923 = vunpack.c.h.b16 %v382
  %v924 = vunpack.c.l.b16 %v383
  %v925 = vunpack.c.h.b16 %v383
  %v926 = vunpack.c.l.b16 %v384
  %v927 = vunpack.c.l.b16 %v385
  %v928 = vunpack.c.h.b16 %v385
  %v929 = vunpack.c.l.b16 %v386
  %v930 = vunpack.c.h.b16 %v386
  %v931 = vunpack.c.l.b16 %v387
  %v932 = vunpack.c.h.b16 %v387
  %v933 = vunpack.c.l.b16 %v388
  %v934 = vunpack.c.h.b16 %v388
  %v935 = vunpack.c.l.b16 %v389
  %v936 = vunpack.c.h.b16 %v389
  %v937 = vunpack.c.l.b16 %v390
  %v938 = vunpack.c.h.b16 %v390
  %v939 = vunpack.c.l.b16 %v391
  %v940 = vunpack.c.l.b16 %v392
  %v941 = vunpack.c.h.b16 %v392
  %v942 = vunpack.c.l.b16 %v393
  %v943 = vunpack.c.h.b16 %v393
  %v944 = vunpack.c.l.b16 %v394
  %v945 = vunpack.c.h.b16 %v394
  %v946 = vunpack.c.l.b16 %v395
  %v947 = vunpack.c.h.b16 %v395
  %v948 = vunpack.c.l.b16 %v396
  %v949 = vunpack.c.h.b16 %v396
  %v950 = vunpack.c.l.b16 %v397
  %v951 = vunpack.c.h.b16 %v397
  %v952 = vunpack.c.l.b16 %v398
  %v953 = vunpack.c.l.b16 %v399
  %v954 = vunpack.c.h.b16 %v399
  %v955 = vunpack.c.l.b16 %v400
  %v956 = vunpack.c.h.b16 %v400
  %v957 = vunpack.c.l.b16 %v401
  %v958 = vunpack.c.h.b16 %v401
  %v959 = vunpack.c.l.b16 %v402
  %v960 = vunpack.c.h.b16 %v402
  %v961 = vunpack.c.l.b16 %v403
  %v962 = vunpack.c.h.b16 %v403
  %v963 = vunpack.c.l.b16 %v404
  %v964 = vunpack.c.h.b16 %v404
  %v965 = vunpack.c.l.b16 %v405
  %v966 = vunpack.c.l.b16 %v406
  %v967 = vunpack.c.h.b16 %v406
  %v968 = vunpack.c.l.b16 %v407
  %v969 = vunpack.c.h.b16 %v407
  %v970 = vunpack.c.l.b16 %v408
  %v971 = vunpack.c.h.b16 %v408
  %v972 = vunpack.c.l.b16 %v409
  %v973 = vunpack.c.h.b16 %v409
  %v974 = vunpack.c.l.b16 %v410
  %v975 = vunpack.c.h.b16 %v410
  %v976 = vunpack.c.l.b16 %v411
  %v977 = vunpack.c.h.b16 %v411
  %v978 = vunpack.c.l.b16 %v412
  %v979 = vunpack.c.l.b16 %v413
  %v980 = vunpack.c.h.b16 %v413
  %v981 = vunpack.c.l.b16 %v414
  %v982 = vunpack.c.h.b16 %v414
  %v983 = vunpack.c.l.b16 %v415
  %v984 = vunpack.c.h.b16 %v415
  %v985 = vunpack.c.l.b16 %v416
  %v986 = vunpack.c.h.b16 %v416
  %v987 = vunpack.c.l.b16 %v417
  %v988 = vunpack.c.h.b16 %v417
  %v989 = vunpack.c.l.b16 %v418
  %v990 = vunpack.c.h.b16 %v418
  %v991 = vunpack.c.l.b16 %v419
  %v992 = vunpack.c.l.b16 %v420
  %v993 = vunpack.c.h.b16 %v420
  %v994 = vunpack.c.l.b16 %v421
  %v995 = vunpack.c.h.b16 %v421
  %v996 = vunpack.c.l.b16 %v422
  %v997 = vunpack.c.h.b16 %v422
  %v998 = vunpack.c.l.b16 %v423
  %v999 = vunpack.c.h.b16 %v423
  %v1000 = vunpack.c.l.b16 %v424
  %v1001 = vunpack.c.h.b16 %v424
  %v1002 = vunpack.c.l.b16 %v425
  %v1003 = vunpack.c.h.b16 %v425
  %v1004 = vunpack.c.l.b16 %v426
  %v1005 = vunpack.c.l.b16 %v427
  %v1006 = vunpack.c.h.b16 %v427
  %v1007 = vunpack.c.l.b16 %v428
  %v1008 = vunpack.c.h.b16 %v428
  %v1009 = vunpack.c.l.b16 %v429
  %v1010 = vunpack.c.h.b16 %v429
  %v1011 = vunpack.c.l.b16 %v430
  %v1012 = vunpack.c.h.b16 %v430
  %v1013 = vunpack.c.l.b16 %v431
  %v1014 = vunpack.c.h.b16 %v431
  %v1015 = vunpack.c.l.b16 %v432
  %v1016 = vunpack.c.h.b16 %v432
  %v1017 = vunpack.c.l.b16 %v433
  %v1018 = vunpack.c.l.b16 %v434
  %v1019 = vunpack.c.h.b16 %v434
  %v1020 = vunpack.c.l.b16 %v435
  %v1021 = vunpack.c.h.b16 %v435
  %v1022 = vunpack.c.l.b16 %v436
  %v1023 = vunpack.c.h.b16 %v436
  %v1024 = vunpack.c.l.b16 %v437
  %v1025 = vunpack.c.h.b16 %v437
  %v1026 = vunpack.c.l.b16 %v438
  %v1027 = vunpack.c.h.b16 %v438
  %v1028 = vunpack.c.l.b16 %v439
  %v1029 = vunpack.c.h.b16 %v439
  %v1030 = vunpack.c.l.b16 %v440
  %v1031 = vunpack.c.l.b16 %v441
  %v1032 = vunpack.c.h.b16 %v441
  %v1033 = vunpack.c.l.b16 %v442
  %v1034 = vunpack.c.h.b16 %v442
  %v1035 = vunpack.c.l.b16 %v443
  %v1036 = vunpack.c.h.b16 %v443
  %v1037 = vunpack.c.l.b16 %v444
  %v1038 = vunpack.c.h.b16 %v444
  %v1039 = vunpack.c.l.b16 %v445
  %v1040 = vunpack.c.h.b16 %v445
  %v1041 = vunpack.c.l.b16 %v446
  %v1042 = vunpack.c.h.b16 %v446
  %v1043 = vunpack.c.l.b16 %v447
  %v1044 = vunpack.c.l.b16 %v448
  %v1045 = vunpack.c.h.b16 %v448
  %v1046 = vunpack.c.l.b16 %v449
  %v1047 = vunpack.c.h.b16 %v449
  %v1048 = vunpack.c.l.b16 %v450
  %v1049 = vunpack.c.h.b16 %v450
  %v1050 = vunpack.c.l.b16 %v451
  %v1051 = vunpack.c.h.b16 %v451
  %v1052 = vunpack.c.l.b16 %v452
  %v1053 = vunpack.c.h.b16 %v452
  %v1054 = vunpack.c.l.b16 %v453
  %v1055 = vunpack.c.h.b16 %v453
  %v1056 = vunpack.c.l.b16 %v454
  %v1057 = vunpack.c.l.b16 %v455
  %v1058 = vunpack.c.h.b16 %v455
  %v1059 = vunpack.c.l.b16 %v456
  %v1060 = vunpack.c.h.b16 %v456
  %v1061 = vunpack.c.l.b16 %v457
  %v1062 = vunpack.c.h.b16 %v457
  %v1063 = vunpack.c.l.b16 %v458
  %v1064 = vunpack.c.h.b16 %v458
  %v1065 = vunpack.c.l.b16 %v459
  %v1066 = vunpack.c.h.b16 %v459
  %v1067 = vunpack.c.l.b16 %v460
  %v1068 = vunpack.c.h.b16 %v460
  %v1069 = vunpack.c.l.b16 %v461
  %v1070 = vunpack.c.l.b16 %v462
  %v1071 = vunpack.c.h.b16 %v462
  %v1072 = vunpack.c.l.b16 %v463
  %v1073 = vunpack.c.h.b16 %v463
  %v1074 = vunpack.c.l.b16 %v464
  %v1075 = vunpack.c.h.b16 %v464
  %v1076 = vunpack.c.l.b16 %v465
  %v1077 = vunpack.c.h.b16 %v465
  %v1078 = vunpack.c.l.b16 %v466
  %v1079 = vunpack.c.h.b16 %v466
  %v1080 = vunpack.c.l.b16 %v467
  %v1081 = vunpack.c.h.b16 %v467
  %v1082 = vunpack.c.l.b16 %v468
  %v1083 = vunpack.c.l.b16 %v469
  %v1084 = vunpack.c.h.b16 %v469
  %v1085 = vunpack.c.l.b16 %v470
  %v1086 = vunpack.c.h.b16 %v470
  %v1087 = vunpack.c.l.b16 %v471
  %v1088 = vunpack.c.h.b16 %v471
  %v1089 = vunpack.c.l.b16 %v472
  %v1090 = vunpack.c.h.b16 %v472
  %v1091 = vunpack.c.l.b16 %v473
  %v1092 = vunpack.c.h.b16 %v473
  %v1093 = vunpack.c.l.b16 %v474
  %v1094 = vunpack.c.h.b16 %v474
  %v1095 = vunpack.c.l.b16 %v475
  %v1096 = vunpack.c.l.b16 %v476
  %v1097 = vunpack.c.h.b16 %v476
  %v1098 = vunpack.c.l.b16 %v477
  %v1099 = vunpack.c.h.b16 %v477
  %v1100 = vunpack.c.l.b16 %v478
  %v1101 = vunpack.c.h.b16 %v478
  %v1102 = vunpack.c.l.b16 %v479
  %v1103 = vunpack.c.h.b16 %v479
  %v1104 = vunpack.c.l.b16 %v480
  %v1105 = vunpack.c.h.b16 %v480
  %v1106 = vunpack.c.l.b16 %v481
  %v1107 = vunpack.c.h.b16 %v481
  %v1108 = vunpack.c.l.b16 %v482
  %v1109 = vunpack.c.l.b16 %v483
  %v1110 = vunpack.c.h.b16 %v483
  %v1111 = vunpack.c.l.b16 %v484
  %v1112 = vunpack.c.h.b16 %v484
  %v1113 = vunpack.c.l.b16 %v485
  %v1114 = vunpack.c.h.b16 %v485
  %v1115 = vunpack.c.l.b16 %v486
  %v1116 = vunpack.c.h.b16 %v486
  %v1117 = vunpack.c.l.b16 %v487
  %v1118 = vunpack.c.h.b16 %v487
  %v1119 = vunpack.c.l.b16 %v488
  %v1120 = vunpack.c.h.b16 %v488
  %v1121 = vunpack.c.l.b16 %v489
  %v1122 = vunpack.c.l.b16 %v490
  %v1123 = vunpack.c.h.b16 %v490
  %v1124 = vunpack.c.l.b16 %v491
  %v1125 = vunpack.c.h.b16 %v491
  %v1126 = vunpack.c.l.b16 %v492
  %v1127 = vunpack.c.h.b16 %v492
  %v1128 = vunpack.c.l.b16 %v493
  %v1129 = vunpack.c.h.b16 %v493
  %v1130 = vunpack.c.l.b16 %v494
  %v1131 = vunpack.c.h.b16 %v494
  %v1132 = vunpack.c.l.b16 %v495
  %v1133 = vunpack.c.h.b16 %v495
  %v1134 = vunpack.c.l.b16 %v496
  %v1135 = vunpack.c.l.b16 %v497
  %v1136 = vunpack.c.h.b16 %v497
  %v1137 = vunpack.c.l.b16 %v498
  %v1138 = vunpack.c.h.b16 %v498
  %v1139 = vunpack.c.l.b16 %v499
  %v1140 = vunpack.c.h.b16 %v499
  %v1141 = vunpack.c.l.b16 %v500
  %v1142 = vunpack.c.h.b16 %v500
  %v1143 = vunpack.c.l.b16 %v501
  %v1144 = vunpack.c.h.b16 %v501
  %v1145 = vunpack.c.l.b16 %v502
  %v1146 = vunpack.c.h.b16 %v502
  %v1147 = vunpack.c.l.b16 %v503
  %v1148 = vunpack.c.l.b16 %v504
  %v1149 = vunpack.c.h.b16 %v504
  %v1150 = vunpack.c.l.b16 %v505
  %v1151 = vunpack.c.h.b16 %v505
  %v1152 = vunpack.c.l.b16 %v506
  %v1153 = vunpack.c.h.b16 %v506
  %v1154 = vunpack.c.l.b16 %v507
  %v1155 = vunpack.c.h.b16 %v507
  %v1156 = vunpack.c.l.b16 %v508
  %v1157 = vunpack.c.h.b16 %v508
  %v1158 = vunpack.c.l.b16 %v509
  %v1159 = vunpack.c.h.b16 %v509
  %v1160 = vunpack.c.l.b16 %v510
  %v1161 = vunpack.c.l.b16 %v511
  %v1162 = vunpack.c.h.b16 %v511
  %v1163 = vunpack.c.l.b16 %v512
  %v1164 = vunpack.c.h.b16 %v512
  %v1165 = vunpack.c.l.b16 %v513
  %v1166 = vunpack.c.h.b16 %v513
  %v1167 = vunpack.c.l.b16 %v514
  %v1168 = vunpack.c.h.b16 %v514
  %v1169 = vunpack.c.l.b16 %v515
  %v1170 = vunpack.c.h.b16 %v515
  %v1171 = vunpack.c.l.b16 %v516
  %v1172 = vunpack.c.h.b16 %v516
  %v1173 = vunpack.c.l.b16 %v517
  %v1174 = vunpack.c.l.b16 %v518
  %v1175 = vunpack.c.h.b16 %v518
  %v1176 = vunpack.c.l.b16 %v519
  %v1177 = vunpack.c.h.b16 %v519
  %v1178 = vunpack.c.l.b16 %v520
  %v1179 = vunpack.c.h.b16 %v520
  %v1180 = vunpack.c.l.b16 %v521
  %v1181 = vunpack.c.h.b16 %v521
  %v1182 = vunpack.c.l.b16 %v522
  %v1183 = vunpack.c.h.b16 %v522
  %v1184 = vunpack.c.l.b16 %v523
  %v1185 = vunpack.c.h.b16 %v523
  %v1186 = vunpack.c.l.b16 %v524
  %v1187 = vunpack.c.l.b16 %v525
  %v1188 = vunpack.c.h.b16 %v525
  %v1189 = vunpack.c.l.b16 %v526
  %v1190 = vunpack.c.h.b16 %v526
  %v1191 = vunpack.c.l.b16 %v527
  %v1192 = vunpack.c.h.b16 %v527
  %v1193 = vunpack.c.l.b16 %v528
  %v1194 = vunpack.c.h.b16 %v528
  %v1195 = vunpack.c.l.b16 %v529
  %v1196 = vunpack.c.h.b16 %v529
  %v1197 = vunpack.c.l.b16 %v530
  %v1198 = vunpack.c.h.b16 %v530
  %v1199 = vunpack.c.l.b16 %v531
  %v1200 = vunpack.c.l.b16 %v532
  %v1201 = vunpack.c.h.b16 %v532
  %v1202 = vunpack.c.l.b16 %v533
  %v1203 = vunpack.c.h.b16 %v533
  %v1204 = vunpack.c.l.b16 %v534
  %v1205 = vunpack.c.h.b16 %v534
  %v1206 = vunpack.c.l.b16 %v535
  %v1207 = vunpack.c.h.b16 %v535
  %v1208 = vunpack.c.l.b16 %v536
  %v1209 = vunpack.c.h.b16 %v536
  %v1210 = vunpack.c.l.b16 %v537
  %v1211 = vunpack.c.h.b16 %v537
  %v1212 = vunpack.c.l.b16 %v538
  %v1213 = vunpack.c.l.b16 %v539
  %v1214 = vunpack.c.h.b16 %v539
  %v1215 = vunpack.c.l.b16 %v540
  %v1216 = vunpack.c.h.b16 %v540
  %v1217 = vunpack.c.l.b16 %v541
  %v1218 = vunpack.c.h.b16 %v541
  %v1219 = vunpack.c.l.b16 %v542
  %v1220 = vunpack.c.h.b16 %v542
  %v1221 = vunpack.c.l.b16 %v543
  %v1222 = vunpack.c.h.b16 %v543
  %v1223 = vunpack.c.l.b16 %v544
  %v1224 = vunpack.c.h.b16 %v544
  %v1225 = vunpack.c.l.b16 %v545
  %v1226 = vpack.c.b16 %v797, %v784
  %v1227 = vpack.c.b16 %v798, %v785
  %v1228 = vpack.c.b16 %v799, %v786
  %v1229 = vpack.c.b16 %v800, %v787
  %v1230 = vpack.c.b16 %v801, %v788
  %v1231 = vpack.c.b16 %v802, %v789
  %v1232 = vpack.c.b16 %v803, %v790
  %v1233 = vpack.c.b16 %v804, %v791
  %v1234 = vpack.c.b16 %v805, %v792
  %v1235 = vpack.c.b16 %v806, %v793
  %v1236 = vpack.c.b16 %v807, %v794
  %v1237 = vpack.c.b16 %v808, %v795
  %v1238 = vpack.c.b16 %v809, %v796
  %v1239 = vpack.c.b16 %v823, %v810
  %v1240 = vpack.c.b16 %v824, %v811
  %v1241 = vpack.c.b16 %v825, %v812
  %v1242 = vpack.c.b16 %v826, %v813
  %v1243 = vpack.c.b16 %v827, %v814
  %v1244 = vpack.c.b16 %v828, %v815
  %v1245 = vpack.c.b16 %v829, %v816
  %v1246 = vpack.c.b16 %v830, %v817
  %v1247 = vpack.c.b16 %v831, %v818
  %v1248 = vpack.c.b16 %v832, %v819
  %v1249 = vpack.c.b16 %v833, %v820
  %v1250 = vpack.c.b16 %v834, %v821
  %v1251 = vpack.c.b16 %v835, %v822
  %v1252 = vpack.c.b16 %v849, %v836
  %v1253 = vpack.c.b16 %v850, %v837
  %v1254 = vpack.c.b16 %v851, %v838
  %v1255 = vpack.c.b16 %v852, %v839
  %v1256 = vpack.c.b16 %v853, %v840
  %v1257 = vpack.c.b16 %v854, %v841
  %v1258 = vpack.c.b16 %v855, %v842
  %v1259 = vpack.c.b16 %v856, %v843
  %v1260 = vpack.c.b16 %v857, %v844
  %v1261 = vpack.c.b16 %v858, %v845
  %v1262 = vpack.c.b16 %v859, %v846
  %v1263 = vpack.c.b16 %v860, %v847
  %v1264 = vpack.c.b16 %v861, %v848
  %v1265 = vpack.c.b16 %v875, %v862
  %v1266 = vpack.c.b16 %v876, %v863
  %v1267 = vpack.c.b16 %v877, %v864
  %v1268 = vpack.c.b16 %v878, %v865
  %v1269 = vpack.c.b16 %v879, %v866
  %v1270 = vpack.c.b16 %v880, %v867
  %v1271 = vpack.c.b16 %v881, %v868
  %v1272 = vpack.c.b16 %v882, %v869
  %v1273 = vpack.c.b16 %v883, %v870
  %v1274 = vpack.c.b16 %v884, %v871
  %v1275 = vpack.c.b16 %v885, %v872
  %v1276 = vpack.c.b16 %v886, %v873
  %v1277 = vpack.c.b16 %v887, %v874
  %v1278 = vpack.c.b16 %v901, %v888
  %v1279 = vpack.c.b16 %v902, %v889
  %v1280 = vpack.c.b16 %v903, %v890
  %v1281 = vpack.c.b16 %v904, %v891
  %v1282 = vpack.c.b16 %v905, %v892
  %v1283 = vpack.c.b16 %v906, %v893
  %v1284 = vpack.c.b16 %v907, %v894
  %v1285 = vpack.c.b16 %v908, %v895
  %v1286 = vpack.c.b16 %v909, %v896
  %v1287 = vpack.c.b16 %v910, %v897
  %v1288 = vpack.c.b16 %v911, %v898
  %v1289 = vpack.c.b16 %v912, %v899
  %v1290 = vpack.c.b16 %v913, %v900
  %v1291 = vpack.c.b16 %v927, %v914
  %v1292 = vpack.c.b16 %v928, %v915
  %v1293 = vpack.c.b16 %v929, %v916
  %v1294 = vpack.c.b16 %v930, %v917
  %v1295 = vpack.c.b16 %v931, %v918
  %v1296 = vpack.c.b16 %v932, %v919
  %v1297 = vpack.c.b16 %v933, %v920
  %v1298 = vpack.c.b16 %v934, %v921
  %v1299 = vpack.c.b16 %v935, %v922
  %v1300 = vpack.c.b16 %v936, %v923
  %v1301 = vpack.c.b16 %v937, %v924
  %v1302 = vpack.c.b16 %v938, %v925
  %v1303 = vpack.c.b16 %v939, %v926
  %v1304 = vpack.c.b16 %v953, %v940
  %v1305 = vpack.c.b16 %v954, %v941
  %v1306 = vpack.c.b16 %v955, %v942
  %v1307 = vpack.c.b16 %v956, %v943
  %v1308 = vpack.c.b16 %v957, %v944
  %v1309 = vpack.c.b16 %v958, %v945
  %v1310 = vpack.c.b16 %v959, %v946
  %v1311 = vpack.c.b16 %v960, %v947
  %v1312 = vpack.c.b16 %v961, %v948
  %v1313 = vpack.c.b16 %v962, %v949
  %v1314 = vpack.c.b16 %v963, %v950
  %v1315 = vpack.c.b16 %v964, %v951
  %v1316 = vpack.c.b16 %v965, %v952
  %v1317 = vpack.c.b16 %v979, %v966
  %v1318 = vpack.c.b16 %v980, %v967
  %v1319 = vpack.c.b16 %v981, %v968
  %v1320 = vpack.c.b16 %v982, %v969
  %v1321 = vpack.c.b16 %v983, %v970
  %v1322 = vpack.c.b16 %v984, %v971
  %v1323 = vpack.c.b16 %v985, %v972
  %v1324 = vpack.c.b16 %v986, %v973
  %v1325 = vpack.c.b16 %v987, %v974
  %v1326 = vpack.c.b16 %v988, %v975
  %v1327 = vpack.c.b16 %v989, %v976
  %v1328 = vpack.c.b16 %v990, %v977
  %v1329 = vpack.c.b16 %v991, %v978
  %v1330 = vpack.c.b16 %v1005, %v992
  %v1331 = vpack.c.b16 %v1006, %v993
  %v1332 = vpack.c.b16 %v1007, %v994
  %v1333 = vpack.c.b16 %v1008, %v995
  %v1334 = vpack.c.b16 %v1009, %v996
  %v1335 = vpack.c.b16 %v1010, %v997
  %v1336 = vpack.c.b16 %v1011, %v998
  %v1337 = vpack.c.b16 %v1012, %v999
  %v1338 = vpack.c.b16 %v1013, %v1000
  %v1339 = vpack.c.b16 %v1014, %v1001
  %v1340 = vpack.c.b16 %v1015, %v1002
  %v1341 = vpack.c.b16 %v1016, %v1003
  %v1342 = vpack.c.b16 %v1017, %v1004
  %v1343 = vpack.c.b16 %v1031, %v1018
  %v1344 = vpack.c.b16 %v1032, %v1019
  %v1345 = vpack.c.b16 %v1033, %v1020
  %v1346 = vpack.c.b16 %v1034, %v1021
  %v1347 = vpack.c.b16 %v1035, %v1022
  %v1348 = vpack.c.b16 %v1036, %v1023
  %v1349 = vpack.c.b16 %v1037, %v1024
  %v1350 = vpack.c.b16 %v1038, %v1025
  %v1351 = vpack.c.b16 %v1039, %v1026
  %v1352 = vpack.c.b16 %v1040, %v1027
  %v1353 = vpack.c.b16 %v1041, %v1028
  %v1354 = vpack.c.b16 %v1042, %v1029
  %v1355 = vpack.c.b16 %v1043, %v1030
  %v1356 = vpack.c.b16 %v1057, %v1044
  %v1357 = vpack.c.b16 %v1058, %v1045
  %v1358 = vpack.c.b16 %v1059, %v1046
  %v1359 = vpack.c.b16 %v1060, %v1047
  %v1360 = vpack.c.b16 %v1061, %v1048
  %v1361 = vpack.c.b16 %v1062, %v1049
  %v1362 = vpack.c.b16 %v1063, %v1050
  %v1363 = vpack.c.b16 %v1064, %v1051
  %v1364 = vpack.c.b16 %v1065, %v1052
  %v1365 = vpack.c.b16 %v1066, %v1053
  %v1366 = vpack.c.b16 %v1067, %v1054
  %v1367 = vpack.c.b16 %v1068, %v1055
  %v1368 = vpack.c.b16 %v1069, %v1056
  %v1369 = vpack.c.b16 %v1083, %v1070
  %v1370 = vpack.c.b16 %v1084, %v1071
  %v1371 = vpack.c.b16 %v1085, %v1072
  %v1372 = vpack.c.b16 %v1086, %v1073
  %v1373 = vpack.c.b16 %v1087, %v1074
  %v1374 = vpack.c.b16 %v1088, %v1075
  %v1375 = vpack.c.b16 %v1089, %v1076
  %v1376 = vpack.c.b16 %v1090, %v1077
  %v1377 = vpack.c.b16 %v1091, %v1078
  %v1378 = vpack.c.b16 %v1092, %v1079
  %v1379 = vpack.c.b16 %v1093, %v1080
  %v1380 = vpack.c.b16 %v1094, %v1081
  %v1381 = vpack.c.b16 %v1095, %v1082
  %v1382 = vpack.c.b16 %v1109, %v1096
  %v1383 = vpack.c.b16 %v1110, %v1097
  %v1384 = vpack.c.b16 %v1111, %v1098
  %v1385 = vpack.c.b16 %v1112, %v1099
  %v1386 = vpack.c.b16 %v1113, %v1100
  %v1387 = vpack.c.b16 %v1114, %v1101
  %v1388 = vpack.c.b16 %v1115, %v1102
  %v1389 = vpack.c.b16 %v1116, %v1103
  %v1390 = vpack.c.b16 %v1117, %v1104
  %v1391 = vpack.c.b16 %v1118, %v1105
  %v1392 = vpack.c.b16 %v1119, %v1106
  %v1393 = vpack.c.b16 %v1120, %v1107
  %v1394 = vpack.c.b16 %v1121, %v1108
  %v1395 = vpack.c.b16 %v1135, %v1122
  %v1396 = vpack.c.b16 %v1136, %v1123
  %v1397 = vpack.c.b16 %v1137, %v1124
  %v1398 = vpack.c.b16 %v1138, %v1125
  %v1399 = vpack.c.b16 %v1139, %v1126
  %v1400 = vpack.c.b16 %v1140, %v1127
  %v1401 = vpack.c.b16 %v1141, %v1128
  %v1402 = vpack.c.b16 %v1142, %v1129
  %v1403 = vpack.c.b16 %v1143, %v1130
  %v1404 = vpack.c.b16 %v1144, %v1131
  %v1405 = vpack.c.b16 %v1145, %v1132
  %v1406 = vpack.c.b16 %v1146, %v1133
  %v1407 = vpack.c.b16 %v1147, %v1134
  %v1408 = vpack.c.b16 %v1161, %v1148
  %v1409 = vpack.c.b16 %v1162, %v1149
  %v1410 = vpack.c.b16 %v1163, %v1150
  %v1411 = vpack.c.b16 %v1164, %v1151
  %v1412 = vpack.c.b16 %v1165, %v1152
  %v1413 = vpack.c.b16 %v1166, %v1153
  %v1414 = vpack.c.b16 %v1167, %v1154
  %v1415 = vpack.c.b16 %v1168, %v1155
  %v1416 = vpack.c.b16 %v1169, %v1156
  %v1417 = vpack.c.b16 %v1170, %v1157
  %v1418 = vpack.c.b16 %v1171, %v1158
  %v1419 = vpack.c.b16 %v1172, %v1159
  %v1420 = vpack.c.b16 %v1173, %v1160
  %v1421 = vpack.c.b16 %v1187, %v1174
  %v1422 = vpack.c.b16 %v1188, %v1175
  %v1423 = vpack.c.b16 %v1189, %v1176
  %v1424 = vpack.c.b16 %v1190, %v1177
  %v1425 = vpack.c.b16 %v1191, %v1178
  %v1426 = vpack.c.b16 %v1192, %v1179
  %v1427 = vpack.c.b16 %v1193, %v1180
  %v1428 = vpack.c.b16 %v1194, %v1181
  %v1429 = vpack.c.b16 %v1195, %v1182
  %v1430 = vpack.c.b16 %v1196, %v1183
  %v1431 = vpack.c.b16 %v1197, %v1184
  %v1432 = vpack.c.b16 %v1198, %v1185
  %v1433 = vpack.c.b16 %v1199, %v1186
  %v1434 = vpack.c.b16 %v1213, %v1200
  %v1435 = vpack.c.b16 %v1214, %v1201
  %v1436 = vpack.c.b16 %v1215, %v1202
  %v1437 = vpack.c.b16 %v1216, %v1203
  %v1438 = vpack.c.b16 %v1217, %v1204
  %v1439 = vpack.c.b16 %v1218, %v1205
  %v1440 = vpack.c.b16 %v1219, %v1206
  %v1441 = vpack.c.b16 %v1220, %v1207
  %v1442 = vpack.c.b16 %v1221, %v1208
  %v1443 = vpack.c.b16 %v1222, %v1209
  %v1444 = vpack.c.b16 %v1223, %v1210
  %v1445 = vpack.c.b16 %v1224, %v1211
  %v1446 = vpack.c.b16 %v1225, %v1212
  %v1669 = vsel %vm66, %v298, 0
  %v1672 = vsel %vm66, %v301, 0
  %v1675 = vsel %vm66, %v304, 0
  %v1678 = vsel %vm66, %v307, 0
  %1680 = vmatprep.subr.bf16.mxu0 %v1227
  %1681 = vmatpush1.bf16.msra.mxu0 %v1226
  %1682 = vmatprep.subr.bf16.mxu0 %v1240
  %1683 = vmatpush1.bf16.msra.mxu0 %v1239
  %1684 = vmatprep.subr.bf16.mxu0 %v1253
  %1685 = vmatpush1.bf16.msra.mxu0 %v1252
  %1686 = vmatprep.subr.bf16.mxu0 %v1266
  %1687 = vmatpush1.bf16.msra.mxu0 %v1265
  %1688 = vmatprep.subr.bf16.mxu0 %v1279
  %1689 = vmatpush1.bf16.msra.mxu0 %v1278
  %1690 = vmatprep.subr.bf16.mxu0 %v1292
  %1691 = vmatpush1.bf16.msra.mxu0 %v1291
  %1692 = vmatprep.subr.bf16.mxu0 %v1305
  %1693 = vmatpush1.bf16.msra.mxu0 %v1304
  %1694 = vmatprep.subr.bf16.mxu0 %v1318
  %1695 = vmatpush1.bf16.msra.mxu0 %v1317
  %1696 = vmatprep.subr.bf16.mxu0 %v1331
  %1697 = vmatpush1.bf16.msra.mxu0 %v1330
  %1698 = vmatprep.subr.bf16.mxu0 %v1344
  %1699 = vmatpush1.bf16.msra.mxu0 %v1343
  %1700 = vmatprep.subr.bf16.mxu0 %v1357
  %1701 = vmatpush1.bf16.msra.mxu0 %v1356
  %1702 = vmatprep.subr.bf16.mxu0 %v1370
  %1703 = vmatpush1.bf16.msra.mxu0 %v1369
  %1704 = vmatprep.subr.bf16.mxu0 %v1383
  %1705 = vmatpush1.bf16.msra.mxu0 %v1382
  %1706 = vmatprep.subr.bf16.mxu0 %v1396
  %1707 = vmatpush1.bf16.msra.mxu0 %v1395
  %1708 = vmatprep.subr.bf16.mxu0 %v1409
  %1709 = vmatpush1.bf16.msra.mxu0 %v1408
  %1710 = vmatprep.subr.bf16.mxu0 %v1422
  %1711 = vmatpush1.bf16.msra.mxu0 %v1421
  %1712 = vmatprep.mubr.bf16.mxu0 %v297
  %1713 = vmatmul.mubr.bf16.gmra.mrb[0].mxu0 %v296
  %v1714 = vpop.f32.mrb[0].mxu0
  %v1715 = vadd.f32 0.0, %v1714
  %v1716 = vpop.f32.mrb[0].mxu0
  %v1717 = vadd.f32 0.0, %v1716
  %v1718 = vpop.f32.mrb[0].mxu0
  %v1719 = vadd.f32 0.0, %v1718
  %v1720 = vpop.f32.mrb[0].mxu0
  %v1721 = vadd.f32 0.0, %v1720
  %1722 = vmatprep.mubr.bf16.mxu0 %v300
  %1723 = vmatmul.mubr.bf16.gmra.mrb[0].mxu0 %v299
  %v1724 = vpop.f32.mrb[0].mxu0
  %v1725 = vadd.f32 0.0, %v1724
  %v1726 = vpop.f32.mrb[0].mxu0
  %v1727 = vadd.f32 0.0, %v1726
  %v1728 = vpop.f32.mrb[0].mxu0
  %v1729 = vadd.f32 0.0, %v1728
  %v1730 = vpop.f32.mrb[0].mxu0
  %v1731 = vadd.f32 0.0, %v1730
  %1732 = vmatprep.mubr.bf16.mxu0 %v303
  %1733 = vmatmul.mubr.bf16.gmra.mrb[0].mxu0 %v302
  %v1734 = vpop.f32.mrb[0].mxu0
  %v1735 = vadd.f32 0.0, %v1734
  %v1736 = vpop.f32.mrb[0].mxu0
  %v1737 = vadd.f32 0.0, %v1736
  %v1738 = vpop.f32.mrb[0].mxu0
  %v1739 = vadd.f32 0.0, %v1738
  %v1740 = vpop.f32.mrb[0].mxu0
  %v1741 = vadd.f32 0.0, %v1740
  %1742 = vmatprep.mubr.bf16.mxu0 %v306
  %1743 = vmatmul.mubr.bf16.gmra.mrb[0].mxu0 %v305
  %v1744 = vpop.f32.mrb[0].mxu0
  %v1745 = vadd.f32 0.0, %v1744
  %v1746 = vpop.f32.mrb[0].mxu0
  %v1747 = vadd.f32 0.0, %v1746
  %v1748 = vpop.f32.mrb[0].mxu0
  %v1749 = vpop.f32.mrb[0].mxu0
  %1750 = vdwg.mxu0
  %1751 = vmatprep.subr.bf16.mxu0 %v1435
  %1752 = vmatpush1.bf16.msra.mxu0 %v1434
  %1753 = vmatprep.subr.bf16.mxu0 0
  %1754 = vmatpush1.bf16.msra.mxu0 0
  %1755 = vmatprep.subr.bf16.mxu0 0
  %1756 = vmatpush1.bf16.msra.mxu0 0
  %1757 = vmatprep.subr.bf16.mxu0 0
  %1758 = vmatpush1.bf16.msra.mxu0 0
  %1759 = vmatprep.subr.bf16.mxu0 0
  %1760 = vmatpush1.bf16.msra.mxu0 0
  %1761 = vmatprep.subr.bf16.mxu0 0
  %1762 = vmatpush1.bf16.msra.mxu0 0
  %1763 = vmatprep.subr.bf16.mxu0 0
  %1764 = vmatpush1.bf16.msra.mxu0 0
  %1765 = vmatprep.subr.bf16.mxu0 0
  %1766 = vmatpush1.bf16.msra.mxu0 0
  %1767 = vmatprep.subr.bf16.mxu0 0
  %1768 = vmatpush1.bf16.msra.mxu0 0
  %1769 = vmatprep.subr.bf16.mxu0 0
  %1770 = vmatpush1.bf16.msra.mxu0 0
  %1771 = vmatprep.subr.bf16.mxu0 0
  %1772 = vmatpush1.bf16.msra.mxu0 0
  %1773 = vmatprep.subr.bf16.mxu0 0
  %1774 = vmatpush1.bf16.msra.mxu0 0
  %1775 = vmatprep.subr.bf16.mxu0 0
  %1776 = vmatpush1.bf16.msra.mxu0 0
  %1777 = vmatprep.subr.bf16.mxu0 0
  %1778 = vmatpush1.bf16.msra.mxu0 0
  %1779 = vmatprep.subr.bf16.mxu0 0
  %1780 = vmatpush1.bf16.msra.mxu0 0
  %1781 = vmatprep.subr.bf16.mxu0 0
  %1782 = vmatpush1.bf16.msra.mxu0 0
  %1783 = vmatprep.mubr.bf16.mxu0 0
  %1784 = vmatmul.mubr.bf16.gmra.mrb[0].mxu0 %v1669
  %v1785 = vpop.f32.mrb[0].mxu0
  %v1786 = vadd.f32 %v1715, %v1785
  %v1787 = vpop.f32.mrb[0].mxu0
  %v1788 = vadd.f32 %v1717, %v1787
  %v1789 = vpop.f32.mrb[0].mxu0
  %v1790 = vadd.f32 %v1719, %v1789
  %v1791 = vpop.f32.mrb[0].mxu0
  %v1792 = vadd.f32 %v1721, %v1791
  %1793 = vmatprep.mubr.bf16.mxu0 0
  %1794 = vmatmul.mubr.bf16.gmra.mrb[0].mxu0 %v1672
  %v1795 = vpop.f32.mrb[0].mxu0
  %v1796 = vadd.f32 %v1725, %v1795
  %v1797 = vpop.f32.mrb[0].mxu0
  %v1798 = vadd.f32 %v1727, %v1797
  %v1799 = vpop.f32.mrb[0].mxu0
  %v1800 = vadd.f32 %v1729, %v1799
  %v1801 = vpop.f32.mrb[0].mxu0
  %v1802 = vadd.f32 %v1731, %v1801
  %1803 = vmatprep.mubr.bf16.mxu0 0
  %1804 = vmatmul.mubr.bf16.gmra.mrb[0].mxu0 %v1675
  %v1805 = vpop.f32.mrb[0].mxu0
  %v1806 = vadd.f32 %v1735, %v1805
  %v1807 = vpop.f32.mrb[0].mxu0
  %v1808 = vadd.f32 %v1737, %v1807
  %v1809 = vpop.f32.mrb[0].mxu0
  %v1810 = vadd.f32 %v1739, %v1809
  %v1811 = vpop.f32.mrb[0].mxu0
  %v1812 = vadd.f32 %v1741, %v1811
  %1813 = vmatprep.mubr.bf16.mxu0 0
  %1814 = vmatmul.mubr.bf16.gmra.mrb[0].mxu0 %v1678
  %v1815 = vpop.f32.mrb[0].mxu0
  %v1816 = vadd.f32 %v1745, %v1815
  %v1817 = vpop.f32.mrb[0].mxu0
  %v1818 = vadd.f32 %v1747, %v1817
  %v1819 = vpop.f32.mrb[0].mxu0
  %v1820 = vpop.f32.mrb[0].mxu0
  %1821 = vdwg.mxu0
  %1822 = vmatprep.subr.bf16.mxu0 %v1229
  %1823 = vmatpush1.bf16.msra.mxu0 %v1228
  %1824 = vmatprep.subr.bf16.mxu0 %v1242
  %1825 = vmatpush1.bf16.msra.mxu0 %v1241
  %1826 = vmatprep.subr.bf16.mxu0 %v1255
  %1827 = vmatpush1.bf16.msra.mxu0 %v1254
  %1828 = vmatprep.subr.bf16.mxu0 %v1268
  %1829 = vmatpush1.bf16.msra.mxu0 %v1267
  %1830 = vmatprep.subr.bf16.mxu0 %v1281
  %1831 = vmatpush1.bf16.msra.mxu0 %v1280
  %1832 = vmatprep.subr.bf16.mxu0 %v1294
  %1833 = vmatpush1.bf16.msra.mxu0 %v1293
  %1834 = vmatprep.subr.bf16.mxu0 %v1307
  %1835 = vmatpush1.bf16.msra.mxu0 %v1306
  %1836 = vmatprep.subr.bf16.mxu0 %v1320
  %1837 = vmatpush1.bf16.msra.mxu0 %v1319
  %1838 = vmatprep.subr.bf16.mxu0 %v1333
  %1839 = vmatpush1.bf16.msra.mxu0 %v1332
  %1840 = vmatprep.subr.bf16.mxu0 %v1346
  %1841 = vmatpush1.bf16.msra.mxu0 %v1345
  %1842 = vmatprep.subr.bf16.mxu0 %v1359
  %1843 = vmatpush1.bf16.msra.mxu0 %v1358
  %1844 = vmatprep.subr.bf16.mxu0 %v1372
  %1845 = vmatpush1.bf16.msra.mxu0 %v1371
  %1846 = vmatprep.subr.bf16.mxu0 %v1385
  %1847 = vmatpush1.bf16.msra.mxu0 %v1384
  %1848 = vmatprep.subr.bf16.mxu0 %v1398
  %1849 = vmatpush1.bf16.msra.mxu0 %v1397
  %1850 = vmatprep.subr.bf16.mxu0 %v1411
  %1851 = vmatpush1.bf16.msra.mxu0 %v1410
  %1852 = vmatprep.subr.bf16.mxu0 %v1424
  %1853 = vmatpush1.bf16.msra.mxu0 %v1423
  %1854 = vmatprep.mubr.bf16.mxu0 %v297
  %1855 = vmatmul.mubr.bf16.gmra.mrb[0].mxu0 %v296
  %v1856 = vpop.f32.mrb[0].mxu0
  %v1857 = vadd.f32 0.0, %v1856
  %v1858 = vpop.f32.mrb[0].mxu0
  %v1859 = vadd.f32 0.0, %v1858
  %v1860 = vpop.f32.mrb[0].mxu0
  %v1861 = vadd.f32 0.0, %v1860
  %v1862 = vpop.f32.mrb[0].mxu0
  %v1863 = vadd.f32 0.0, %v1862
  %1864 = vmatprep.mubr.bf16.mxu0 %v300
  %1865 = vmatmul.mubr.bf16.gmra.mrb[0].mxu0 %v299
  %v1866 = vpop.f32.mrb[0].mxu0
  %v1867 = vadd.f32 0.0, %v1866
  %v1868 = vpop.f32.mrb[0].mxu0
  %v1869 = vadd.f32 0.0, %v1868
  %v1870 = vpop.f32.mrb[0].mxu0
  %v1871 = vadd.f32 0.0, %v1870
  %v1872 = vpop.f32.mrb[0].mxu0
  %v1873 = vadd.f32 0.0, %v1872
  %1874 = vmatprep.mubr.bf16.mxu0 %v303
  %1875 = vmatmul.mubr.bf16.gmra.mrb[0].mxu0 %v302
  %v1876 = vpop.f32.mrb[0].mxu0
  %v1877 = vadd.f32 0.0, %v1876
  %v1878 = vpop.f32.mrb[0].mxu0
  %v1879 = vadd.f32 0.0, %v1878
  %v1880 = vpop.f32.mrb[0].mxu0
  %v1881 = vadd.f32 0.0, %v1880
  %v1882 = vpop.f32.mrb[0].mxu0
  %v1883 = vadd.f32 0.0, %v1882
  %1884 = vmatprep.mubr.bf16.mxu0 %v306
  %1885 = vmatmul.mubr.bf16.gmra.mrb[0].mxu0 %v305
  %v1886 = vpop.f32.mrb[0].mxu0
  %v1887 = vadd.f32 0.0, %v1886
  %v1888 = vpop.f32.mrb[0].mxu0
  %v1889 = vadd.f32 0.0, %v1888
  %v1890 = vpop.f32.mrb[0].mxu0
  %v1891 = vpop.f32.mrb[0].mxu0
  %1892 = vdwg.mxu0
  %1893 = vmatprep.subr.bf16.mxu0 %v1437
  %1894 = vmatpush1.bf16.msra.mxu0 %v1436
  %1895 = vmatprep.subr.bf16.mxu0 0
  %1896 = vmatpush1.bf16.msra.mxu0 0
  %1897 = vmatprep.subr.bf16.mxu0 0
  %1898 = vmatpush1.bf16.msra.mxu0 0
  %1899 = vmatprep.subr.bf16.mxu0 0
  %1900 = vmatpush1.bf16.msra.mxu0 0
  %1901 = vmatprep.subr.bf16.mxu0 0
  %1902 = vmatpush1.bf16.msra.mxu0 0
  %1903 = vmatprep.subr.bf16.mxu0 0
  %1904 = vmatpush1.bf16.msra.mxu0 0
  %1905 = vmatprep.subr.bf16.mxu0 0
  %1906 = vmatpush1.bf16.msra.mxu0 0
  %1907 = vmatprep.subr.bf16.mxu0 0
  %1908 = vmatpush1.bf16.msra.mxu0 0
  %1909 = vmatprep.subr.bf16.mxu0 0
  %1910 = vmatpush1.bf16.msra.mxu0 0
  %1911 = vmatprep.subr.bf16.mxu0 0
  %1912 = vmatpush1.bf16.msra.mxu0 0
  %1913 = vmatprep.subr.bf16.mxu0 0
  %1914 = vmatpush1.bf16.msra.mxu0 0
  %1915 = vmatprep.subr.bf16.mxu0 0
  %1916 = vmatpush1.bf16.msra.mxu0 0
  %1917 = vmatprep.subr.bf16.mxu0 0
  %1918 = vmatpush1.bf16.msra.mxu0 0
  %1919 = vmatprep.subr.bf16.mxu0 0
  %1920 = vmatpush1.bf16.msra.mxu0 0
  %1921 = vmatprep.subr.bf16.mxu0 0
  %1922 = vmatpush1.bf16.msra.mxu0 0
  %1923 = vmatprep.subr.bf16.mxu0 0
  %1924 = vmatpush1.bf16.msra.mxu0 0
  %1925 = vmatprep.mubr.bf16.mxu0 0
  %1926 = vmatmul.mubr.bf16.gmra.mrb[0].mxu0 %v1669
  %v1927 = vpop.f32.mrb[0].mxu0
  %v1928 = vadd.f32 %v1857, %v1927
  %v1929 = vpop.f32.mrb[0].mxu0
  %v1930 = vadd.f32 %v1859, %v1929
  %v1931 = vpop.f32.mrb[0].mxu0
  %v1932 = vadd.f32 %v1861, %v1931
  %v1933 = vpop.f32.mrb[0].mxu0
  %v1934 = vadd.f32 %v1863, %v1933
  %1935 = vmatprep.mubr.bf16.mxu0 0
  %1936 = vmatmul.mubr.bf16.gmra.mrb[0].mxu0 %v1672
  %v1937 = vpop.f32.mrb[0].mxu0
  %v1938 = vadd.f32 %v1867, %v1937
  %v1939 = vpop.f32.mrb[0].mxu0
  %v1940 = vadd.f32 %v1869, %v1939
  %v1941 = vpop.f32.mrb[0].mxu0
  %v1942 = vadd.f32 %v1871, %v1941
  %v1943 = vpop.f32.mrb[0].mxu0
  %v1944 = vadd.f32 %v1873, %v1943
  %1945 = vmatprep.mubr.bf16.mxu0 0
  %1946 = vmatmul.mubr.bf16.gmra.mrb[0].mxu0 %v1675
  %v1947 = vpop.f32.mrb[0].mxu0
  %v1948 = vadd.f32 %v1877, %v1947
  %v1949 = vpop.f32.mrb[0].mxu0
  %v1950 = vadd.f32 %v1879, %v1949
  %v1951 = vpop.f32.mrb[0].mxu0
  %v1952 = vadd.f32 %v1881, %v1951
  %v1953 = vpop.f32.mrb[0].mxu0
  %v1954 = vadd.f32 %v1883, %v1953
  %1955 = vmatprep.mubr.bf16.mxu0 0
  %1956 = vmatmul.mubr.bf16.gmra.mrb[0].mxu0 %v1678
  %v1957 = vpop.f32.mrb[0].mxu0
  %v1958 = vadd.f32 %v1887, %v1957
  %v1959 = vpop.f32.mrb[0].mxu0
  %v1960 = vadd.f32 %v1889, %v1959
  %v1961 = vpop.f32.mrb[0].mxu0
  %v1962 = vpop.f32.mrb[0].mxu0
  %1963 = vdwg.mxu0
  %1964 = vmatprep.subr.bf16.mxu0 %v1231
  %1965 = vmatpush1.bf16.msra.mxu0 %v1230
  %1966 = vmatprep.subr.bf16.mxu0 %v1244
  %1967 = vmatpush1.bf16.msra.mxu0 %v1243
  %1968 = vmatprep.subr.bf16.mxu0 %v1257
  %1969 = vmatpush1.bf16.msra.mxu0 %v1256
  %1970 = vmatprep.subr.bf16.mxu0 %v1270
  %1971 = vmatpush1.bf16.msra.mxu0 %v1269
  %1972 = vmatprep.subr.bf16.mxu0 %v1283
  %1973 = vmatpush1.bf16.msra.mxu0 %v1282
  %1974 = vmatprep.subr.bf16.mxu0 %v1296
  %1975 = vmatpush1.bf16.msra.mxu0 %v1295
  %1976 = vmatprep.subr.bf16.mxu0 %v1309
  %1977 = vmatpush1.bf16.msra.mxu0 %v1308
  %1978 = vmatprep.subr.bf16.mxu0 %v1322
  %1979 = vmatpush1.bf16.msra.mxu0 %v1321
  %1980 = vmatprep.subr.bf16.mxu0 %v1335
  %1981 = vmatpush1.bf16.msra.mxu0 %v1334
  %1982 = vmatprep.subr.bf16.mxu0 %v1348
  %1983 = vmatpush1.bf16.msra.mxu0 %v1347
  %1984 = vmatprep.subr.bf16.mxu0 %v1361
  %1985 = vmatpush1.bf16.msra.mxu0 %v1360
  %1986 = vmatprep.subr.bf16.mxu0 %v1374
  %1987 = vmatpush1.bf16.msra.mxu0 %v1373
  %1988 = vmatprep.subr.bf16.mxu0 %v1387
  %1989 = vmatpush1.bf16.msra.mxu0 %v1386
  %1990 = vmatprep.subr.bf16.mxu0 %v1400
  %1991 = vmatpush1.bf16.msra.mxu0 %v1399
  %1992 = vmatprep.subr.bf16.mxu0 %v1413
  %1993 = vmatpush1.bf16.msra.mxu0 %v1412
  %1994 = vmatprep.subr.bf16.mxu0 %v1426
  %1995 = vmatpush1.bf16.msra.mxu0 %v1425
  %1996 = vmatprep.mubr.bf16.mxu0 %v297
  %1997 = vmatmul.mubr.bf16.gmra.mrb[0].mxu0 %v296
  %v1998 = vpop.f32.mrb[0].mxu0
  %v1999 = vadd.f32 0.0, %v1998
  %v2000 = vpop.f32.mrb[0].mxu0
  %v2001 = vadd.f32 0.0, %v2000
  %v2002 = vpop.f32.mrb[0].mxu0
  %v2003 = vadd.f32 0.0, %v2002
  %v2004 = vpop.f32.mrb[0].mxu0
  %v2005 = vadd.f32 0.0, %v2004
  %2006 = vmatprep.mubr.bf16.mxu0 %v300
  %2007 = vmatmul.mubr.bf16.gmra.mrb[0].mxu0 %v299
  %v2008 = vpop.f32.mrb[0].mxu0
  %v2009 = vadd.f32 0.0, %v2008
  %v2010 = vpop.f32.mrb[0].mxu0
  %v2011 = vadd.f32 0.0, %v2010
  %v2012 = vpop.f32.mrb[0].mxu0
  %v2013 = vadd.f32 0.0, %v2012
  %v2014 = vpop.f32.mrb[0].mxu0
  %v2015 = vadd.f32 0.0, %v2014
  %2016 = vmatprep.mubr.bf16.mxu0 %v303
  %2017 = vmatmul.mubr.bf16.gmra.mrb[0].mxu0 %v302
  %v2018 = vpop.f32.mrb[0].mxu0
  %v2019 = vadd.f32 0.0, %v2018
  %v2020 = vpop.f32.mrb[0].mxu0
  %v2021 = vadd.f32 0.0, %v2020
  %v2022 = vpop.f32.mrb[0].mxu0
  %v2023 = vadd.f32 0.0, %v2022
  %v2024 = vpop.f32.mrb[0].mxu0
  %v2025 = vadd.f32 0.0, %v2024
  %2026 = vmatprep.mubr.bf16.mxu0 %v306
  %2027 = vmatmul.mubr.bf16.gmra.mrb[0].mxu0 %v305
  %v2028 = vpop.f32.mrb[0].mxu0
  %v2029 = vadd.f32 0.0, %v2028
  %v2030 = vpop.f32.mrb[0].mxu0
  %v2031 = vadd.f32 0.0, %v2030
  %v2032 = vpop.f32.mrb[0].mxu0
  %v2033 = vpop.f32.mrb[0].mxu0
  %2034 = vdwg.mxu0
  %2035 = vmatprep.subr.bf16.mxu0 %v1439
  %2036 = vmatpush1.bf16.msra.mxu0 %v1438
  %2037 = vmatprep.subr.bf16.mxu0 0
  %2038 = vmatpush1.bf16.msra.mxu0 0
  %2039 = vmatprep.subr.bf16.mxu0 0
  %2040 = vmatpush1.bf16.msra.mxu0 0
  %2041 = vmatprep.subr.bf16.mxu0 0
  %2042 = vmatpush1.bf16.msra.mxu0 0
  %2043 = vmatprep.subr.bf16.mxu0 0
  %2044 = vmatpush1.bf16.msra.mxu0 0
  %2045 = vmatprep.subr.bf16.mxu0 0
  %2046 = vmatpush1.bf16.msra.mxu0 0
  %2047 = vmatprep.subr.bf16.mxu0 0
  %2048 = vmatpush1.bf16.msra.mxu0 0
  %2049 = vmatprep.subr.bf16.mxu0 0
  %2050 = vmatpush1.bf16.msra.mxu0 0
  %2051 = vmatprep.subr.bf16.mxu0 0
  %2052 = vmatpush1.bf16.msra.mxu0 0
  %2053 = vmatprep.subr.bf16.mxu0 0
  %2054 = vmatpush1.bf16.msra.mxu0 0
  %2055 = vmatprep.subr.bf16.mxu0 0
  %2056 = vmatpush1.bf16.msra.mxu0 0
  %2057 = vmatprep.subr.bf16.mxu0 0
  %2058 = vmatpush1.bf16.msra.mxu0 0
  %2059 = vmatprep.subr.bf16.mxu0 0
  %2060 = vmatpush1.bf16.msra.mxu0 0
  %2061 = vmatprep.subr.bf16.mxu0 0
  %2062 = vmatpush1.bf16.msra.mxu0 0
  %2063 = vmatprep.subr.bf16.mxu0 0
  %2064 = vmatpush1.bf16.msra.mxu0 0
  %2065 = vmatprep.subr.bf16.mxu0 0
  %2066 = vmatpush1.bf16.msra.mxu0 0
  %2067 = vmatprep.mubr.bf16.mxu0 0
  %2068 = vmatmul.mubr.bf16.gmra.mrb[0].mxu0 %v1669
  %v2069 = vpop.f32.mrb[0].mxu0
  %v2070 = vadd.f32 %v1999, %v2069
  %v2071 = vpop.f32.mrb[0].mxu0
  %v2072 = vadd.f32 %v2001, %v2071
  %v2073 = vpop.f32.mrb[0].mxu0
  %v2074 = vadd.f32 %v2003, %v2073
  %v2075 = vpop.f32.mrb[0].mxu0
  %v2076 = vadd.f32 %v2005, %v2075
  %2077 = vmatprep.mubr.bf16.mxu0 0
  %2078 = vmatmul.mubr.bf16.gmra.mrb[0].mxu0 %v1672
  %v2079 = vpop.f32.mrb[0].mxu0
  %v2080 = vadd.f32 %v2009, %v2079
  %v2081 = vpop.f32.mrb[0].mxu0
  %v2082 = vadd.f32 %v2011, %v2081
  %v2083 = vpop.f32.mrb[0].mxu0
  %v2084 = vadd.f32 %v2013, %v2083
  %v2085 = vpop.f32.mrb[0].mxu0
  %v2086 = vadd.f32 %v2015, %v2085
  %2087 = vmatprep.mubr.bf16.mxu0 0
  %2088 = vmatmul.mubr.bf16.gmra.mrb[0].mxu0 %v1675
  %v2089 = vpop.f32.mrb[0].mxu0
  %v2090 = vadd.f32 %v2019, %v2089
  %v2091 = vpop.f32.mrb[0].mxu0
  %v2092 = vadd.f32 %v2021, %v2091
  %v2093 = vpop.f32.mrb[0].mxu0
  %v2094 = vadd.f32 %v2023, %v2093
  %v2095 = vpop.f32.mrb[0].mxu0
  %v2096 = vadd.f32 %v2025, %v2095
  %2097 = vmatprep.mubr.bf16.mxu0 0
  %2098 = vmatmul.mubr.bf16.gmra.mrb[0].mxu0 %v1678
  %v2099 = vpop.f32.mrb[0].mxu0
  %v2100 = vadd.f32 %v2029, %v2099
  %v2101 = vpop.f32.mrb[0].mxu0
  %v2102 = vadd.f32 %v2031, %v2101
  %v2103 = vpop.f32.mrb[0].mxu0
  %v2104 = vpop.f32.mrb[0].mxu0
  %2105 = vdwg.mxu0
  %2106 = vmatprep.subr.bf16.mxu0 %v1233
  %2107 = vmatpush1.bf16.msra.mxu0 %v1232
  %2108 = vmatprep.subr.bf16.mxu0 %v1246
  %2109 = vmatpush1.bf16.msra.mxu0 %v1245
  %2110 = vmatprep.subr.bf16.mxu0 %v1259
  %2111 = vmatpush1.bf16.msra.mxu0 %v1258
  %2112 = vmatprep.subr.bf16.mxu0 %v1272
  %2113 = vmatpush1.bf16.msra.mxu0 %v1271
  %2114 = vmatprep.subr.bf16.mxu0 %v1285
  %2115 = vmatpush1.bf16.msra.mxu0 %v1284
  %2116 = vmatprep.subr.bf16.mxu0 %v1298
  %2117 = vmatpush1.bf16.msra.mxu0 %v1297
  %2118 = vmatprep.subr.bf16.mxu0 %v1311
  %2119 = vmatpush1.bf16.msra.mxu0 %v1310
  %2120 = vmatprep.subr.bf16.mxu0 %v1324
  %2121 = vmatpush1.bf16.msra.mxu0 %v1323
  %2122 = vmatprep.subr.bf16.mxu0 %v1337
  %2123 = vmatpush1.bf16.msra.mxu0 %v1336
  %2124 = vmatprep.subr.bf16.mxu0 %v1350
  %2125 = vmatpush1.bf16.msra.mxu0 %v1349
  %2126 = vmatprep.subr.bf16.mxu0 %v1363
  %2127 = vmatpush1.bf16.msra.mxu0 %v1362
  %2128 = vmatprep.subr.bf16.mxu0 %v1376
  %2129 = vmatpush1.bf16.msra.mxu0 %v1375
  %2130 = vmatprep.subr.bf16.mxu0 %v1389
  %2131 = vmatpush1.bf16.msra.mxu0 %v1388
  %2132 = vmatprep.subr.bf16.mxu0 %v1402
  %2133 = vmatpush1.bf16.msra.mxu0 %v1401
  %2134 = vmatprep.subr.bf16.mxu0 %v1415
  %2135 = vmatpush1.bf16.msra.mxu0 %v1414
  %2136 = vmatprep.subr.bf16.mxu0 %v1428
  %2137 = vmatpush1.bf16.msra.mxu0 %v1427
  %2138 = vmatprep.mubr.bf16.mxu0 %v297
  %2139 = vmatmul.mubr.bf16.gmra.mrb[0].mxu0 %v296
  %v2140 = vpop.f32.mrb[0].mxu0
  %v2141 = vadd.f32 0.0, %v2140
  %v2142 = vpop.f32.mrb[0].mxu0
  %v2143 = vadd.f32 0.0, %v2142
  %v2144 = vpop.f32.mrb[0].mxu0
  %v2145 = vadd.f32 0.0, %v2144
  %v2146 = vpop.f32.mrb[0].mxu0
  %v2147 = vadd.f32 0.0, %v2146
  %2148 = vmatprep.mubr.bf16.mxu0 %v300
  %2149 = vmatmul.mubr.bf16.gmra.mrb[0].mxu0 %v299
  %v2150 = vpop.f32.mrb[0].mxu0
  %v2151 = vadd.f32 0.0, %v2150
  %v2152 = vpop.f32.mrb[0].mxu0
  %v2153 = vadd.f32 0.0, %v2152
  %v2154 = vpop.f32.mrb[0].mxu0
  %v2155 = vadd.f32 0.0, %v2154
  %v2156 = vpop.f32.mrb[0].mxu0
  %v2157 = vadd.f32 0.0, %v2156
  %2158 = vmatprep.mubr.bf16.mxu0 %v303
  %2159 = vmatmul.mubr.bf16.gmra.mrb[0].mxu0 %v302
  %v2160 = vpop.f32.mrb[0].mxu0
  %v2161 = vadd.f32 0.0, %v2160
  %v2162 = vpop.f32.mrb[0].mxu0
  %v2163 = vadd.f32 0.0, %v2162
  %v2164 = vpop.f32.mrb[0].mxu0
  %v2165 = vadd.f32 0.0, %v2164
  %v2166 = vpop.f32.mrb[0].mxu0
  %v2167 = vadd.f32 0.0, %v2166
  %2168 = vmatprep.mubr.bf16.mxu0 %v306
  %2169 = vmatmul.mubr.bf16.gmra.mrb[0].mxu0 %v305
  %v2170 = vpop.f32.mrb[0].mxu0
  %v2171 = vadd.f32 0.0, %v2170
  %v2172 = vpop.f32.mrb[0].mxu0
  %v2173 = vadd.f32 0.0, %v2172
  %v2174 = vpop.f32.mrb[0].mxu0
  %v2175 = vpop.f32.mrb[0].mxu0
  %2176 = vdwg.mxu0
  %2177 = vmatprep.subr.bf16.mxu0 %v1441
  %2178 = vmatpush1.bf16.msra.mxu0 %v1440
  %2179 = vmatprep.subr.bf16.mxu0 0
  %2180 = vmatpush1.bf16.msra.mxu0 0
  %2181 = vmatprep.subr.bf16.mxu0 0
  %2182 = vmatpush1.bf16.msra.mxu0 0
  %2183 = vmatprep.subr.bf16.mxu0 0
  %2184 = vmatpush1.bf16.msra.mxu0 0
  %2185 = vmatprep.subr.bf16.mxu0 0
  %2186 = vmatpush1.bf16.msra.mxu0 0
  %2187 = vmatprep.subr.bf16.mxu0 0
  %2188 = vmatpush1.bf16.msra.mxu0 0
  %2189 = vmatprep.subr.bf16.mxu0 0
  %2190 = vmatpush1.bf16.msra.mxu0 0
  %2191 = vmatprep.subr.bf16.mxu0 0
  %2192 = vmatpush1.bf16.msra.mxu0 0
  %2193 = vmatprep.subr.bf16.mxu0 0
  %2194 = vmatpush1.bf16.msra.mxu0 0
  %2195 = vmatprep.subr.bf16.mxu0 0
  %2196 = vmatpush1.bf16.msra.mxu0 0
  %2197 = vmatprep.subr.bf16.mxu0 0
  %2198 = vmatpush1.bf16.msra.mxu0 0
  %2199 = vmatprep.subr.bf16.mxu0 0
  %2200 = vmatpush1.bf16.msra.mxu0 0
  %2201 = vmatprep.subr.bf16.mxu0 0
  %2202 = vmatpush1.bf16.msra.mxu0 0
  %2203 = vmatprep.subr.bf16.mxu0 0
  %2204 = vmatpush1.bf16.msra.mxu0 0
  %2205 = vmatprep.subr.bf16.mxu0 0
  %2206 = vmatpush1.bf16.msra.mxu0 0
  %2207 = vmatprep.subr.bf16.mxu0 0
  %2208 = vmatpush1.bf16.msra.mxu0 0
  %2209 = vmatprep.mubr.bf16.mxu0 0
  %2210 = vmatmul.mubr.bf16.gmra.mrb[0].mxu0 %v1669
  %v2211 = vpop.f32.mrb[0].mxu0
  %v2212 = vadd.f32 %v2141, %v2211
  %v2213 = vpop.f32.mrb[0].mxu0
  %v2214 = vadd.f32 %v2143, %v2213
  %v2215 = vpop.f32.mrb[0].mxu0
  %v2216 = vadd.f32 %v2145, %v2215
  %v2217 = vpop.f32.mrb[0].mxu0
  %v2218 = vadd.f32 %v2147, %v2217
  %2219 = vmatprep.mubr.bf16.mxu0 0
  %2220 = vmatmul.mubr.bf16.gmra.mrb[0].mxu0 %v1672
  %v2221 = vpop.f32.mrb[0].mxu0
  %v2222 = vadd.f32 %v2151, %v2221
  %v2223 = vpop.f32.mrb[0].mxu0
  %v2224 = vadd.f32 %v2153, %v2223
  %v2225 = vpop.f32.mrb[0].mxu0
  %v2226 = vadd.f32 %v2155, %v2225
  %v2227 = vpop.f32.mrb[0].mxu0
  %v2228 = vadd.f32 %v2157, %v2227
  %2229 = vmatprep.mubr.bf16.mxu0 0
  %2230 = vmatmul.mubr.bf16.gmra.mrb[0].mxu0 %v1675
  %v2231 = vpop.f32.mrb[0].mxu0
  %v2232 = vadd.f32 %v2161, %v2231
  %v2233 = vpop.f32.mrb[0].mxu0
  %v2234 = vadd.f32 %v2163, %v2233
  %v2235 = vpop.f32.mrb[0].mxu0
  %v2236 = vadd.f32 %v2165, %v2235
  %v2237 = vpop.f32.mrb[0].mxu0
  %v2238 = vadd.f32 %v2167, %v2237
  %2239 = vmatprep.mubr.bf16.mxu0 0
  %2240 = vmatmul.mubr.bf16.gmra.mrb[0].mxu0 %v1678
  %v2241 = vpop.f32.mrb[0].mxu0
  %v2242 = vadd.f32 %v2171, %v2241
  %v2243 = vpop.f32.mrb[0].mxu0
  %v2244 = vadd.f32 %v2173, %v2243
  %v2245 = vpop.f32.mrb[0].mxu0
  %v2246 = vpop.f32.mrb[0].mxu0
  %2247 = vdwg.mxu0
  %2248 = vmatprep.subr.bf16.mxu0 %v1235
  %2249 = vmatpush1.bf16.msra.mxu0 %v1234
  %2250 = vmatprep.subr.bf16.mxu0 %v1248
  %2251 = vmatpush1.bf16.msra.mxu0 %v1247
  %2252 = vmatprep.subr.bf16.mxu0 %v1261
  %2253 = vmatpush1.bf16.msra.mxu0 %v1260
  %2254 = vmatprep.subr.bf16.mxu0 %v1274
  %2255 = vmatpush1.bf16.msra.mxu0 %v1273
  %2256 = vmatprep.subr.bf16.mxu0 %v1287
  %2257 = vmatpush1.bf16.msra.mxu0 %v1286
  %2258 = vmatprep.subr.bf16.mxu0 %v1300
  %2259 = vmatpush1.bf16.msra.mxu0 %v1299
  %2260 = vmatprep.subr.bf16.mxu0 %v1313
  %2261 = vmatpush1.bf16.msra.mxu0 %v1312
  %2262 = vmatprep.subr.bf16.mxu0 %v1326
  %2263 = vmatpush1.bf16.msra.mxu0 %v1325
  %2264 = vmatprep.subr.bf16.mxu0 %v1339
  %2265 = vmatpush1.bf16.msra.mxu0 %v1338
  %2266 = vmatprep.subr.bf16.mxu0 %v1352
  %2267 = vmatpush1.bf16.msra.mxu0 %v1351
  %2268 = vmatprep.subr.bf16.mxu0 %v1365
  %2269 = vmatpush1.bf16.msra.mxu0 %v1364
  %2270 = vmatprep.subr.bf16.mxu0 %v1378
  %2271 = vmatpush1.bf16.msra.mxu0 %v1377
  %2272 = vmatprep.subr.bf16.mxu0 %v1391
  %2273 = vmatpush1.bf16.msra.mxu0 %v1390
  %2274 = vmatprep.subr.bf16.mxu0 %v1404
  %2275 = vmatpush1.bf16.msra.mxu0 %v1403
  %2276 = vmatprep.subr.bf16.mxu0 %v1417
  %2277 = vmatpush1.bf16.msra.mxu0 %v1416
  %2278 = vmatprep.subr.bf16.mxu0 %v1430
  %2279 = vmatpush1.bf16.msra.mxu0 %v1429
  %2280 = vmatprep.mubr.bf16.mxu0 %v297
  %2281 = vmatmul.mubr.bf16.gmra.mrb[0].mxu0 %v296
  %v2282 = vpop.f32.mrb[0].mxu0
  %v2283 = vadd.f32 0.0, %v2282
  %v2284 = vpop.f32.mrb[0].mxu0
  %v2285 = vadd.f32 0.0, %v2284
  %v2286 = vpop.f32.mrb[0].mxu0
  %v2287 = vadd.f32 0.0, %v2286
  %v2288 = vpop.f32.mrb[0].mxu0
  %v2289 = vadd.f32 0.0, %v2288
  %2290 = vmatprep.mubr.bf16.mxu0 %v300
  %2291 = vmatmul.mubr.bf16.gmra.mrb[0].mxu0 %v299
  %v2292 = vpop.f32.mrb[0].mxu0
  %v2293 = vadd.f32 0.0, %v2292
  %v2294 = vpop.f32.mrb[0].mxu0
  %v2295 = vadd.f32 0.0, %v2294
  %v2296 = vpop.f32.mrb[0].mxu0
  %v2297 = vadd.f32 0.0, %v2296
  %v2298 = vpop.f32.mrb[0].mxu0
  %v2299 = vadd.f32 0.0, %v2298
  %2300 = vmatprep.mubr.bf16.mxu0 %v303
  %2301 = vmatmul.mubr.bf16.gmra.mrb[0].mxu0 %v302
  %v2302 = vpop.f32.mrb[0].mxu0
  %v2303 = vadd.f32 0.0, %v2302
  %v2304 = vpop.f32.mrb[0].mxu0
  %v2305 = vadd.f32 0.0, %v2304
  %v2306 = vpop.f32.mrb[0].mxu0
  %v2307 = vadd.f32 0.0, %v2306
  %v2308 = vpop.f32.mrb[0].mxu0
  %v2309 = vadd.f32 0.0, %v2308
  %2310 = vmatprep.mubr.bf16.mxu0 %v306
  %2311 = vmatmul.mubr.bf16.gmra.mrb[0].mxu0 %v305
  %v2312 = vpop.f32.mrb[0].mxu0
  %v2313 = vadd.f32 0.0, %v2312
  %v2314 = vpop.f32.mrb[0].mxu0
  %v2315 = vadd.f32 0.0, %v2314
  %v2316 = vpop.f32.mrb[0].mxu0
  %v2317 = vpop.f32.mrb[0].mxu0
  %2318 = vdwg.mxu0
  %2319 = vmatprep.subr.bf16.mxu0 %v1443
  %2320 = vmatpush1.bf16.msra.mxu0 %v1442
  %2321 = vmatprep.subr.bf16.mxu0 0
  %2322 = vmatpush1.bf16.msra.mxu0 0
  %2323 = vmatprep.subr.bf16.mxu0 0
  %2324 = vmatpush1.bf16.msra.mxu0 0
  %2325 = vmatprep.subr.bf16.mxu0 0
  %2326 = vmatpush1.bf16.msra.mxu0 0
  %2327 = vmatprep.subr.bf16.mxu0 0
  %2328 = vmatpush1.bf16.msra.mxu0 0
  %2329 = vmatprep.subr.bf16.mxu0 0
  %2330 = vmatpush1.bf16.msra.mxu0 0
  %2331 = vmatprep.subr.bf16.mxu0 0
  %2332 = vmatpush1.bf16.msra.mxu0 0
  %2333 = vmatprep.subr.bf16.mxu0 0
  %2334 = vmatpush1.bf16.msra.mxu0 0
  %2335 = vmatprep.subr.bf16.mxu0 0
  %2336 = vmatpush1.bf16.msra.mxu0 0
  %2337 = vmatprep.subr.bf16.mxu0 0
  %2338 = vmatpush1.bf16.msra.mxu0 0
  %2339 = vmatprep.subr.bf16.mxu0 0
  %2340 = vmatpush1.bf16.msra.mxu0 0
  %2341 = vmatprep.subr.bf16.mxu0 0
  %2342 = vmatpush1.bf16.msra.mxu0 0
  %2343 = vmatprep.subr.bf16.mxu0 0
  %2344 = vmatpush1.bf16.msra.mxu0 0
  %2345 = vmatprep.subr.bf16.mxu0 0
  %2346 = vmatpush1.bf16.msra.mxu0 0
  %2347 = vmatprep.subr.bf16.mxu0 0
  %2348 = vmatpush1.bf16.msra.mxu0 0
  %2349 = vmatprep.subr.bf16.mxu0 0
  %2350 = vmatpush1.bf16.msra.mxu0 0
  %2351 = vmatprep.mubr.bf16.mxu0 0
  %2352 = vmatmul.mubr.bf16.gmra.mrb[0].mxu0 %v1669
  %v2353 = vpop.f32.mrb[0].mxu0
  %v2354 = vadd.f32 %v2283, %v2353
  %v2355 = vpop.f32.mrb[0].mxu0
  %v2356 = vadd.f32 %v2285, %v2355
  %v2357 = vpop.f32.mrb[0].mxu0
  %v2358 = vadd.f32 %v2287, %v2357
  %v2359 = vpop.f32.mrb[0].mxu0
  %v2360 = vadd.f32 %v2289, %v2359
  %2361 = vmatprep.mubr.bf16.mxu0 0
  %2362 = vmatmul.mubr.bf16.gmra.mrb[0].mxu0 %v1672
  %v2363 = vpop.f32.mrb[0].mxu0
  %v2364 = vadd.f32 %v2293, %v2363
  %v2365 = vpop.f32.mrb[0].mxu0
  %v2366 = vadd.f32 %v2295, %v2365
  %v2367 = vpop.f32.mrb[0].mxu0
  %v2368 = vadd.f32 %v2297, %v2367
  %v2369 = vpop.f32.mrb[0].mxu0
  %v2370 = vadd.f32 %v2299, %v2369
  %2371 = vmatprep.mubr.bf16.mxu0 0
  %2372 = vmatmul.mubr.bf16.gmra.mrb[0].mxu0 %v1675
  %v2373 = vpop.f32.mrb[0].mxu0
  %v2374 = vadd.f32 %v2303, %v2373
  %v2375 = vpop.f32.mrb[0].mxu0
  %v2376 = vadd.f32 %v2305, %v2375
  %v2377 = vpop.f32.mrb[0].mxu0
  %v2378 = vadd.f32 %v2307, %v2377
  %v2379 = vpop.f32.mrb[0].mxu0
  %v2380 = vadd.f32 %v2309, %v2379
  %2381 = vmatprep.mubr.bf16.mxu0 0
  %2382 = vmatmul.mubr.bf16.gmra.mrb[0].mxu0 %v1678
  %v2383 = vpop.f32.mrb[0].mxu0
  %v2384 = vadd.f32 %v2313, %v2383
  %v2385 = vpop.f32.mrb[0].mxu0
  %v2386 = vadd.f32 %v2315, %v2385
  %v2387 = vpop.f32.mrb[0].mxu0
  %v2388 = vpop.f32.mrb[0].mxu0
  %2389 = vdwg.mxu0
  %2390 = vmatprep.subr.bf16.mxu0 %v1237
  %2391 = vmatpush1.bf16.msra.mxu0 %v1236
  %2392 = vmatprep.subr.bf16.mxu0 %v1250
  %2393 = vmatpush1.bf16.msra.mxu0 %v1249
  %2394 = vmatprep.subr.bf16.mxu0 %v1263
  %2395 = vmatpush1.bf16.msra.mxu0 %v1262
  %2396 = vmatprep.subr.bf16.mxu0 %v1276
  %2397 = vmatpush1.bf16.msra.mxu0 %v1275
  %2398 = vmatprep.subr.bf16.mxu0 %v1289
  %2399 = vmatpush1.bf16.msra.mxu0 %v1288
  %2400 = vmatprep.subr.bf16.mxu0 %v1302
  %2401 = vmatpush1.bf16.msra.mxu0 %v1301
  %2402 = vmatprep.subr.bf16.mxu0 %v1315
  %2403 = vmatpush1.bf16.msra.mxu0 %v1314
  %2404 = vmatprep.subr.bf16.mxu0 %v1328
  %2405 = vmatpush1.bf16.msra.mxu0 %v1327
  %2406 = vmatprep.subr.bf16.mxu0 %v1341
  %2407 = vmatpush1.bf16.msra.mxu0 %v1340
  %2408 = vmatprep.subr.bf16.mxu0 %v1354
  %2409 = vmatpush1.bf16.msra.mxu0 %v1353
  %2410 = vmatprep.subr.bf16.mxu0 %v1367
  %2411 = vmatpush1.bf16.msra.mxu0 %v1366
  %2412 = vmatprep.subr.bf16.mxu0 %v1380
  %2413 = vmatpush1.bf16.msra.mxu0 %v1379
  %2414 = vmatprep.subr.bf16.mxu0 %v1393
  %2415 = vmatpush1.bf16.msra.mxu0 %v1392
  %2416 = vmatprep.subr.bf16.mxu0 %v1406
  %2417 = vmatpush1.bf16.msra.mxu0 %v1405
  %2418 = vmatprep.subr.bf16.mxu0 %v1419
  %2419 = vmatpush1.bf16.msra.mxu0 %v1418
  %2420 = vmatprep.subr.bf16.mxu0 %v1432
  %2421 = vmatpush1.bf16.msra.mxu0 %v1431
  %2422 = vmatprep.mubr.bf16.mxu0 %v297
  %2423 = vmatmul.mubr.bf16.gmra.mrb[0].mxu0 %v296
  %v2424 = vpop.f32.mrb[0].mxu0
  %v2425 = vadd.f32 0.0, %v2424
  %v2426 = vpop.f32.mrb[0].mxu0
  %v2427 = vadd.f32 0.0, %v2426
  %v2428 = vpop.f32.mrb[0].mxu0
  %v2429 = vadd.f32 0.0, %v2428
  %v2430 = vpop.f32.mrb[0].mxu0
  %v2431 = vadd.f32 0.0, %v2430
  %2432 = vmatprep.mubr.bf16.mxu0 %v300
  %2433 = vmatmul.mubr.bf16.gmra.mrb[0].mxu0 %v299
  %v2434 = vpop.f32.mrb[0].mxu0
  %v2435 = vadd.f32 0.0, %v2434
  %v2436 = vpop.f32.mrb[0].mxu0
  %v2437 = vadd.f32 0.0, %v2436
  %v2438 = vpop.f32.mrb[0].mxu0
  %v2439 = vadd.f32 0.0, %v2438
  %v2440 = vpop.f32.mrb[0].mxu0
  %v2441 = vadd.f32 0.0, %v2440
  %2442 = vmatprep.mubr.bf16.mxu0 %v303
  %2443 = vmatmul.mubr.bf16.gmra.mrb[0].mxu0 %v302
  %v2444 = vpop.f32.mrb[0].mxu0
  %v2445 = vadd.f32 0.0, %v2444
  %v2446 = vpop.f32.mrb[0].mxu0
  %v2447 = vadd.f32 0.0, %v2446
  %v2448 = vpop.f32.mrb[0].mxu0
  %v2449 = vadd.f32 0.0, %v2448
  %v2450 = vpop.f32.mrb[0].mxu0
  %v2451 = vadd.f32 0.0, %v2450
  %2452 = vmatprep.mubr.bf16.mxu0 %v306
  %2453 = vmatmul.mubr.bf16.gmra.mrb[0].mxu0 %v305
  %v2454 = vpop.f32.mrb[0].mxu0
  %v2455 = vadd.f32 0.0, %v2454
  %v2456 = vpop.f32.mrb[0].mxu0
  %v2457 = vadd.f32 0.0, %v2456
  %v2458 = vpop.f32.mrb[0].mxu0
  %v2459 = vpop.f32.mrb[0].mxu0
  %2460 = vdwg.mxu0
  %2461 = vmatprep.subr.bf16.mxu0 %v1445
  %2462 = vmatpush1.bf16.msra.mxu0 %v1444
  %2463 = vmatprep.subr.bf16.mxu0 0
  %2464 = vmatpush1.bf16.msra.mxu0 0
  %2465 = vmatprep.subr.bf16.mxu0 0
  %2466 = vmatpush1.bf16.msra.mxu0 0
  %2467 = vmatprep.subr.bf16.mxu0 0
  %2468 = vmatpush1.bf16.msra.mxu0 0
  %2469 = vmatprep.subr.bf16.mxu0 0
  %2470 = vmatpush1.bf16.msra.mxu0 0
  %2471 = vmatprep.subr.bf16.mxu0 0
  %2472 = vmatpush1.bf16.msra.mxu0 0
  %2473 = vmatprep.subr.bf16.mxu0 0
  %2474 = vmatpush1.bf16.msra.mxu0 0
  %2475 = vmatprep.subr.bf16.mxu0 0
  %2476 = vmatpush1.bf16.msra.mxu0 0
  %2477 = vmatprep.subr.bf16.mxu0 0
  %2478 = vmatpush1.bf16.msra.mxu0 0
  %2479 = vmatprep.subr.bf16.mxu0 0
  %2480 = vmatpush1.bf16.msra.mxu0 0
  %2481 = vmatprep.subr.bf16.mxu0 0
  %2482 = vmatpush1.bf16.msra.mxu0 0
  %2483 = vmatprep.subr.bf16.mxu0 0
  %2484 = vmatpush1.bf16.msra.mxu0 0
  %2485 = vmatprep.subr.bf16.mxu0 0
  %2486 = vmatpush1.bf16.msra.mxu0 0
  %2487 = vmatprep.subr.bf16.mxu0 0
  %2488 = vmatpush1.bf16.msra.mxu0 0
  %2489 = vmatprep.subr.bf16.mxu0 0
  %2490 = vmatpush1.bf16.msra.mxu0 0
  %2491 = vmatprep.subr.bf16.mxu0 0
  %2492 = vmatpush1.bf16.msra.mxu0 0
  %2493 = vmatprep.mubr.bf16.mxu0 0
  %2494 = vmatmul.mubr.bf16.gmra.mrb[0].mxu0 %v1669
  %v2495 = vpop.f32.mrb[0].mxu0
  %v2496 = vadd.f32 %v2425, %v2495
  %v2497 = vpop.f32.mrb[0].mxu0
  %v2498 = vadd.f32 %v2427, %v2497
  %v2499 = vpop.f32.mrb[0].mxu0
  %v2500 = vadd.f32 %v2429, %v2499
  %v2501 = vpop.f32.mrb[0].mxu0
  %v2502 = vadd.f32 %v2431, %v2501
  %2503 = vmatprep.mubr.bf16.mxu0 0
  %2504 = vmatmul.mubr.bf16.gmra.mrb[0].mxu0 %v1672
  %v2505 = vpop.f32.mrb[0].mxu0
  %v2506 = vadd.f32 %v2435, %v2505
  %v2507 = vpop.f32.mrb[0].mxu0
  %v2508 = vadd.f32 %v2437, %v2507
  %v2509 = vpop.f32.mrb[0].mxu0
  %v2510 = vadd.f32 %v2439, %v2509
  %v2511 = vpop.f32.mrb[0].mxu0
  %v2512 = vadd.f32 %v2441, %v2511
  %2513 = vmatprep.mubr.bf16.mxu0 0
  %2514 = vmatmul.mubr.bf16.gmra.mrb[0].mxu0 %v1675
  %v2515 = vpop.f32.mrb[0].mxu0
  %v2516 = vadd.f32 %v2445, %v2515
  %v2517 = vpop.f32.mrb[0].mxu0
  %v2518 = vadd.f32 %v2447, %v2517
  %v2519 = vpop.f32.mrb[0].mxu0
  %v2520 = vadd.f32 %v2449, %v2519
  %v2521 = vpop.f32.mrb[0].mxu0
  %v2522 = vadd.f32 %v2451, %v2521
  %2523 = vmatprep.mubr.bf16.mxu0 0
  %2524 = vmatmul.mubr.bf16.gmra.mrb[0].mxu0 %v1678
  %v2525 = vpop.f32.mrb[0].mxu0
  %v2526 = vadd.f32 %v2455, %v2525
  %v2527 = vpop.f32.mrb[0].mxu0
  %v2528 = vadd.f32 %v2457, %v2527
  %v2529 = vpop.f32.mrb[0].mxu0
  %v2530 = vpop.f32.mrb[0].mxu0
  %2531 = vdwg.mxu0
  %2532 = vmatprep.subr.bf16.mxu0 0
  %2533 = vmatpush1.bf16.msra.mxu0 %v1238
  %2534 = vmatprep.subr.bf16.mxu0 0
  %2535 = vmatpush1.bf16.msra.mxu0 %v1251
  %2536 = vmatprep.subr.bf16.mxu0 0
  %2537 = vmatpush1.bf16.msra.mxu0 %v1264
  %2538 = vmatprep.subr.bf16.mxu0 0
  %2539 = vmatpush1.bf16.msra.mxu0 %v1277
  %2540 = vmatprep.subr.bf16.mxu0 0
  %2541 = vmatpush1.bf16.msra.mxu0 %v1290
  %2542 = vmatprep.subr.bf16.mxu0 0
  %2543 = vmatpush1.bf16.msra.mxu0 %v1303
  %2544 = vmatprep.subr.bf16.mxu0 0
  %2545 = vmatpush1.bf16.msra.mxu0 %v1316
  %2546 = vmatprep.subr.bf16.mxu0 0
  %2547 = vmatpush1.bf16.msra.mxu0 %v1329
  %2548 = vmatprep.subr.bf16.mxu0 0
  %2549 = vmatpush1.bf16.msra.mxu0 %v1342
  %2550 = vmatprep.subr.bf16.mxu0 0
  %2551 = vmatpush1.bf16.msra.mxu0 %v1355
  %2552 = vmatprep.subr.bf16.mxu0 0
  %2553 = vmatpush1.bf16.msra.mxu0 %v1368
  %2554 = vmatprep.subr.bf16.mxu0 0
  %2555 = vmatpush1.bf16.msra.mxu0 %v1381
  %2556 = vmatprep.subr.bf16.mxu0 0
  %2557 = vmatpush1.bf16.msra.mxu0 %v1394
  %2558 = vmatprep.subr.bf16.mxu0 0
  %2559 = vmatpush1.bf16.msra.mxu0 %v1407
  %2560 = vmatprep.subr.bf16.mxu0 0
  %2561 = vmatpush1.bf16.msra.mxu0 %v1420
  %2562 = vmatprep.subr.bf16.mxu0 0
  %2563 = vmatpush1.bf16.msra.mxu0 %v1433
  %2564 = vmatprep.mubr.bf16.mxu0 %v297
  %2565 = vmatmul.mubr.bf16.gmra.mrb[0].mxu0 %v296
  %v2566 = vpop.f32.mrb[0].mxu0
  %v2567 = vadd.f32 0.0, %v2566
  %v2568 = vpop.f32.mrb[0].mxu0
  %v2569 = vpop.f32.mrb[0].mxu0
  %v2570 = vadd.f32 0.0, %v2569
  %v2571 = vpop.f32.mrb[0].mxu0
  %2572 = vmatprep.mubr.bf16.mxu0 %v300
  %2573 = vmatmul.mubr.bf16.gmra.mrb[0].mxu0 %v299
  %v2574 = vpop.f32.mrb[0].mxu0
  %v2575 = vadd.f32 0.0, %v2574
  %v2576 = vpop.f32.mrb[0].mxu0
  %v2577 = vpop.f32.mrb[0].mxu0
  %v2578 = vadd.f32 0.0, %v2577
  %v2579 = vpop.f32.mrb[0].mxu0
  %2580 = vmatprep.mubr.bf16.mxu0 %v303
  %2581 = vmatmul.mubr.bf16.gmra.mrb[0].mxu0 %v302
  %v2582 = vpop.f32.mrb[0].mxu0
  %v2583 = vadd.f32 0.0, %v2582
  %v2584 = vpop.f32.mrb[0].mxu0
  %v2585 = vpop.f32.mrb[0].mxu0
  %v2586 = vadd.f32 0.0, %v2585
  %v2587 = vpop.f32.mrb[0].mxu0
  %2588 = vmatprep.mubr.bf16.mxu0 %v306
  %2589 = vmatmul.mubr.bf16.gmra.mrb[0].mxu0 %v305
  %v2590 = vpop.f32.mrb[0].mxu0
  %v2591 = vadd.f32 0.0, %v2590
  %v2592 = vpop.f32.mrb[0].mxu0
  %v2593 = vpop.f32.mrb[0].mxu0
  %v2594 = vpop.f32.mrb[0].mxu0
  %2595 = vdwg.mxu0
  %2596 = vmatprep.subr.bf16.mxu0 0
  %2597 = vmatpush1.bf16.msra.mxu0 %v1446
  %2598 = vmatprep.subr.bf16.mxu0 0
  %2599 = vmatpush1.bf16.msra.mxu0 0
  %2600 = vmatprep.subr.bf16.mxu0 0
  %2601 = vmatpush1.bf16.msra.mxu0 0
  %2602 = vmatprep.subr.bf16.mxu0 0
  %2603 = vmatpush1.bf16.msra.mxu0 0
  %2604 = vmatprep.subr.bf16.mxu0 0
  %2605 = vmatpush1.bf16.msra.mxu0 0
  %2606 = vmatprep.subr.bf16.mxu0 0
  %2607 = vmatpush1.bf16.msra.mxu0 0
  %2608 = vmatprep.subr.bf16.mxu0 0
  %2609 = vmatpush1.bf16.msra.mxu0 0
  %2610 = vmatprep.subr.bf16.mxu0 0
  %2611 = vmatpush1.bf16.msra.mxu0 0
  %2612 = vmatprep.subr.bf16.mxu0 0
  %2613 = vmatpush1.bf16.msra.mxu0 0
  %2614 = vmatprep.subr.bf16.mxu0 0
  %2615 = vmatpush1.bf16.msra.mxu0 0
  %2616 = vmatprep.subr.bf16.mxu0 0
  %2617 = vmatpush1.bf16.msra.mxu0 0
  %2618 = vmatprep.subr.bf16.mxu0 0
  %2619 = vmatpush1.bf16.msra.mxu0 0
  %2620 = vmatprep.subr.bf16.mxu0 0
  %2621 = vmatpush1.bf16.msra.mxu0 0
  %2622 = vmatprep.subr.bf16.mxu0 0
  %2623 = vmatpush1.bf16.msra.mxu0 0
  %2624 = vmatprep.subr.bf16.mxu0 0
  %2625 = vmatpush1.bf16.msra.mxu0 0
  %2626 = vmatprep.subr.bf16.mxu0 0
  %2627 = vmatpush1.bf16.msra.mxu0 0
  %2628 = vmatprep.mubr.bf16.mxu0 0
  %2629 = vmatmul.mubr.bf16.gmra.mrb[0].mxu0 %v1669
  %v2630 = vpop.f32.mrb[0].mxu0
  %v2631 = vadd.f32 %v2567, %v2630
  %v2632 = vpop.f32.mrb[0].mxu0
  %v2633 = vpop.f32.mrb[0].mxu0
  %v2634 = vadd.f32 %v2570, %v2633
  %v2635 = vpop.f32.mrb[0].mxu0
  %2636 = vmatprep.mubr.bf16.mxu0 0
  %2637 = vmatmul.mubr.bf16.gmra.mrb[0].mxu0 %v1672
  %v2638 = vpop.f32.mrb[0].mxu0
  %v2639 = vadd.f32 %v2575, %v2638
  %v2640 = vpop.f32.mrb[0].mxu0
  %v2641 = vpop.f32.mrb[0].mxu0
  %v2642 = vadd.f32 %v2578, %v2641
  %v2643 = vpop.f32.mrb[0].mxu0
  %2644 = vmatprep.mubr.bf16.mxu0 0
  %2645 = vmatmul.mubr.bf16.gmra.mrb[0].mxu0 %v1675
  %v2646 = vpop.f32.mrb[0].mxu0
  %v2647 = vadd.f32 %v2583, %v2646
  %v2648 = vpop.f32.mrb[0].mxu0
  %v2649 = vpop.f32.mrb[0].mxu0
  %v2650 = vadd.f32 %v2586, %v2649
  %v2651 = vpop.f32.mrb[0].mxu0
  %2652 = vmatprep.mubr.bf16.mxu0 0
  %2653 = vmatmul.mubr.bf16.gmra.mrb[0].mxu0 %v1678
  %v2654 = vpop.f32.mrb[0].mxu0
  %v2655 = vadd.f32 %v2591, %v2654
  %v2656 = vpop.f32.mrb[0].mxu0
  %v2657 = vpop.f32.mrb[0].mxu0
  %v2658 = vpop.f32.mrb[0].mxu0
  %2659 = vdwg.mxu0
  %2660 = vst [vmem:[%s4] sm:$0xff] %v1786
  %2661 = vst [vmem:[%s4 + $0x8] sm:$0xff] %v1788
  %2662 = vst [vmem:[%s4 + $0x10] sm:$0xff] %v1928
  %2663 = vst [vmem:[%s4 + $0x18] sm:$0xff] %v1930
  %2664 = vst [vmem:[%s4 + $0x20] sm:$0xff] %v2070
  %2665 = vst [vmem:[%s4 + $0x28] sm:$0xff] %v2072
  %2666 = vst [vmem:[%s4 + $0x30] sm:$0xff] %v2212
  %2667 = vst [vmem:[%s4 + $0x38] sm:$0xff] %v2214
  %2668 = vst [vmem:[%s4 + $0x40] sm:$0xff] %v2354
  %2669 = vst [vmem:[%s4 + $0x48] sm:$0xff] %v2356
  %2670 = vst [vmem:[%s4 + $0x50] sm:$0xff] %v2496
  %2671 = vst [vmem:[%s4 + $0x58] sm:$0xff] %v2498
  %2672 = vst [vmem:[%s4 + $0x60] sm:$0xff] %v2631
  %2673 = vst [vmem:[%s4 + $0x68] sm:$0xff] %v1790
  %2674 = vst [vmem:[%s4 + $0x70] sm:$0xff] %v1792
  %2675 = vst [vmem:[%s4 + $0x78] sm:$0xff] %v1932
  %2676 = vst [vmem:[%s4 + $0x80] sm:$0xff] %v1934
  %2677 = vst [vmem:[%s4 + $0x88] sm:$0xff] %v2074
  %2678 = vst [vmem:[%s4 + $0x90] sm:$0xff] %v2076
  %2679 = vst [vmem:[%s4 + $0x98] sm:$0xff] %v2216
  %2680 = vst [vmem:[%s4 + $0xa0] sm:$0xff] %v2218
  %2681 = vst [vmem:[%s4 + $0xa8] sm:$0xff] %v2358
  %2682 = vst [vmem:[%s4 + $0xb0] sm:$0xff] %v2360
  %2683 = vst [vmem:[%s4 + $0xb8] sm:$0xff] %v2500
  %2684 = vst [vmem:[%s4 + $0xc0] sm:$0xff] %v2502
  %2685 = vst [vmem:[%s4 + $0xc8] sm:$0xff] %v2634
  %2686 = vst [vmem:[%s4 + $0xd0] sm:$0xff] %v1796
  %2687 = vst [vmem:[%s4 + $0xd8] sm:$0xff] %v1798
  %2688 = vst [vmem:[%s4 + $0xe0] sm:$0xff] %v1938
  %2689 = vst [vmem:[%s4 + $0xe8] sm:$0xff] %v1940
  %2690 = vst [vmem:[%s4 + $0xf0] sm:$0xff] %v2080
  %2691 = vst [vmem:[%s4 + $0xf8] sm:$0xff] %v2082
  %2692 = vst [vmem:[%s4 + $0x100] sm:$0xff] %v2222
  %2693 = vst [vmem:[%s4 + $0x108] sm:$0xff] %v2224
  %2694 = vst [vmem:[%s4 + $0x110] sm:$0xff] %v2364
  %2695 = vst [vmem:[%s4 + $0x118] sm:$0xff] %v2366
  %2696 = vst [vmem:[%s4 + $0x120] sm:$0xff] %v2506
  %2697 = vst [vmem:[%s4 + $0x128] sm:$0xff] %v2508
  %2698 = vst [vmem:[%s4 + $0x130] sm:$0xff] %v2639
  %2699 = vst [vmem:[%s4 + $0x138] sm:$0xff] %v1800
  %2700 = vst [vmem:[%s4 + $0x140] sm:$0xff] %v1802
  %2701 = vst [vmem:[%s4 + $0x148] sm:$0xff] %v1942
  %2702 = vst [vmem:[%s4 + $0x150] sm:$0xff] %v1944
  %2703 = vst [vmem:[%s4 + $0x158] sm:$0xff] %v2084
  %2704 = vst [vmem:[%s4 + $0x160] sm:$0xff] %v2086
  %2705 = vst [vmem:[%s4 + $0x168] sm:$0xff] %v2226
  %2706 = vst [vmem:[%s4 + $0x170] sm:$0xff] %v2228
  %2707 = vst [vmem:[%s4 + $0x178] sm:$0xff] %v2368
  %2708 = vst [vmem:[%s4 + $0x180] sm:$0xff] %v2370
  %2709 = vst [vmem:[%s4 + $0x188] sm:$0xff] %v2510
  %2710 = vst [vmem:[%s4 + $0x190] sm:$0xff] %v2512
  %2711 = vst [vmem:[%s4 + $0x198] sm:$0xff] %v2642
  %2712 = vst [vmem:[%s4 + $0x1a0] sm:$0xff] %v1806
  %2713 = vst [vmem:[%s4 + $0x1a8] sm:$0xff] %v1808
  %2714 = vst [vmem:[%s4 + $0x1b0] sm:$0xff] %v1948
  %2715 = vst [vmem:[%s4 + $0x1b8] sm:$0xff] %v1950
  %2716 = vst [vmem:[%s4 + $0x1c0] sm:$0xff] %v2090
  %2717 = vst [vmem:[%s4 + $0x1c8] sm:$0xff] %v2092
  %2718 = vst [vmem:[%s4 + $0x1d0] sm:$0xff] %v2232
  %2719 = vst [vmem:[%s4 + $0x1d8] sm:$0xff] %v2234
  %2720 = vst [vmem:[%s4 + $0x1e0] sm:$0xff] %v2374
  %2721 = vst [vmem:[%s4 + $0x1e8] sm:$0xff] %v2376
  %2722 = vst [vmem:[%s4 + $0x1f0] sm:$0xff] %v2516
  %2723 = vst [vmem:[%s4 + $0x1f8] sm:$0xff] %v2518
  %2724 = vst [vmem:[%s4 + $0x200] sm:$0xff] %v2647
  %2725 = vst [vmem:[%s4 + $0x208] sm:$0xff] %v1810
  %2726 = vst [vmem:[%s4 + $0x210] sm:$0xff] %v1812
  %2727 = vst [vmem:[%s4 + $0x218] sm:$0xff] %v1952
  %2728 = vst [vmem:[%s4 + $0x220] sm:$0xff] %v1954
  %2729 = vst [vmem:[%s4 + $0x228] sm:$0xff] %v2094
  %2730 = vst [vmem:[%s4 + $0x230] sm:$0xff] %v2096
  %2731 = vst [vmem:[%s4 + $0x238] sm:$0xff] %v2236
  %2732 = vst [vmem:[%s4 + $0x240] sm:$0xff] %v2238
  %2733 = vst [vmem:[%s4 + $0x248] sm:$0xff] %v2378
  %2734 = vst [vmem:[%s4 + $0x250] sm:$0xff] %v2380
  %2735 = vst [vmem:[%s4 + $0x258] sm:$0xff] %v2520
  %2736 = vst [vmem:[%s4 + $0x260] sm:$0xff] %v2522
  %2737 = vst [vmem:[%s4 + $0x268] sm:$0xff] %v2650
  %2738 = vst [vmem:[%s4 + $0x270] sm:$0x1] %v1816
  %2739 = vst [vmem:[%s4 + $0x278] sm:$0x1] %v1818
  %2740 = vst [vmem:[%s4 + $0x280] sm:$0x1] %v1958
  %2741 = vst [vmem:[%s4 + $0x288] sm:$0x1] %v1960
  %2742 = vst [vmem:[%s4 + $0x290] sm:$0x1] %v2100
  %2743 = vst [vmem:[%s4 + $0x298] sm:$0x1] %v2102
  %2744 = vst [vmem:[%s4 + $0x2a0] sm:$0x1] %v2242
  %2745 = vst [vmem:[%s4 + $0x2a8] sm:$0x1] %v2244
  %2746 = vst [vmem:[%s4 + $0x2b0] sm:$0x1] %v2384
  %2747 = vst [vmem:[%s4 + $0x2b8] sm:$0x1] %v2386
  %2748 = vst [vmem:[%s4 + $0x2c0] sm:$0x1] %v2526
  %2749 = vst [vmem:[%s4 + $0x2c8] sm:$0x1] %v2528
  %2750 = vst [vmem:[%s4 + $0x2d0] sm:$0x1] %v2655
  // Predicated region
  $region18: #{bn_conv1x1.1} parent=0 // pred_check
    _
  $region19: #{bn_conv1x1.1} parent=0 // pred_check_branch
    %2752 = sbr.rel (0) target = $region21
  $region20: #{bn_conv1x1.1} parent=0 // pred_region
    _
  $region21: #{bn_conv1x1.1} parent=0 // pred_fallthru
    _
  // Predicated region
  $region22: #{bn_conv1x1.1} parent=0 // pred_check
    _
  $region23: #{bn_conv1x1.1} parent=0 // pred_check_branch
    %2754 = sbr.rel (0) target = $region25
  $region24: #{bn_conv1x1.1} parent=0 // pred_region
    _
  $region25: #{bn_conv1x1.1} parent=0 // pred_fallthru
    _

</llo_original>
